<compile_context>
chip_gen: v7x
topology: tpu7x:2x2x1
jax: 0.10.0
libtpu: 0.0.40
codegen_flags: <defaults>
</compile_context>

<pallas_src>
import jax
import jax.numpy as jnp
from jax.experimental import pallas as pl
from jax.experimental.pallas import tpu as pltpu

EPS = 1e-5


def bn_relu_kernel_2d(x_ref, gamma_ref, beta_ref, o_ref):
    # x_ref:     (TC, HW) f32  -- one channel tile, all spatial positions (N==1)
    # gamma_ref: (C, 1) f32    -- full parameter vectors, resident across steps
    # beta_ref:  (C, 1) f32
    j = pl.program_id(0)
    x = x_ref[...]
    tc, hw = x.shape
    inv_count = 1.0 / float(hw)

    # One read pass: per-channel sum and sum of squares (lane-axis reduction).
    s = jnp.sum(x, axis=1, keepdims=True)            # (TC, 1)
    ss = jnp.sum(x * x, axis=1, keepdims=True)       # (TC, 1)
    mean = s * inv_count
    var = ss * inv_count - mean * mean               # biased variance (training BN)
    var = jnp.maximum(var, 0.0)                      # guard against f32 cancellation
    inv = jax.lax.rsqrt(var + EPS)                   # (TC, 1)

    # Slice this tile's gamma/beta from the resident full-length blocks.
    off = pl.multiple_of(j * tc, tc)
    g = gamma_ref[pl.ds(off, tc), :]                 # (TC, 1)
    b = beta_ref[pl.ds(off, tc), :]                  # (TC, 1)

    # Fold affine into one scale/shift -> one FMA + ReLU per element.
    scale = g * inv
    shift = b - mean * scale
    o_ref[...] = jnp.maximum(x * scale + shift, 0.0)


def bn_relu_kernel_3d(x_ref, gamma_ref, beta_ref, o_ref):
    # Fallback for N > 1.  x_ref: (N, TC, HW) f32.
    j = pl.program_id(0)
    x = x_ref[...]
    n, tc, hw = x.shape
    inv_count = 1.0 / float(n * hw)

    s = jnp.sum(x, axis=(0, 2), keepdims=True)       # (1, TC, 1)
    ss = jnp.sum(x * x, axis=(0, 2), keepdims=True)  # (1, TC, 1)
    mean = s * inv_count
    var = jnp.maximum(ss * inv_count - mean * mean, 0.0)
    inv = jax.lax.rsqrt(var + EPS)

    off = pl.multiple_of(j * tc, tc)
    g = gamma_ref[pl.ds(off, tc), :][None]           # (1, TC, 1)
    b = beta_ref[pl.ds(off, tc), :][None]            # (1, TC, 1)

    scale = g * inv
    shift = b - mean * scale
    o_ref[...] = jnp.maximum(x * scale + shift, 0.0)


def _pick_channel_tile(c, tc_max):
    """Largest divisor of c that is <= tc_max and keeps the sublane dim legal
    (multiple of 8, or the full dim)."""
    tc_max = max(1, min(tc_max, c))
    for t in range(tc_max, 0, -1):
        if c % t == 0 and (t % 8 == 0 or t == c):
            return t
    return c


def batchnorm_relu(x_nchw, gamma, beta, *, tc=256):
    """x_nchw: (N, C, H, W) f32; gamma, beta: (C,) f32 -> (N, C, H, W) f32."""
    n, c, h, w = x_nchw.shape
    hw = h * w
    tc = _pick_channel_tile(c, tc)
    grid = (c // tc,)

    # gamma/beta: one full (C, 1) block, constant index_map -> fetched once.
    gamma2d = gamma.reshape(c, 1)
    beta2d = beta.reshape(c, 1)
    gb_spec = pl.BlockSpec((c, 1), lambda j: (0, 0))

    cparams = pltpu.CompilerParams(
        dimension_semantics=("parallel",),
        vmem_limit_bytes=16 << 20,
    )

    if n == 1:
        # Free reshape: drop the degenerate batch axis -> clean 2-D tiles.
        x2d = x_nchw.reshape(c, hw)
        out2d = pl.pallas_call(
            bn_relu_kernel_2d,
            out_shape=jax.ShapeDtypeStruct((c, hw), x2d.dtype),
            grid=grid,
            in_specs=[
                pl.BlockSpec((tc, hw), lambda j: (j, 0)),
                gb_spec,
                gb_spec,
            ],
            out_specs=pl.BlockSpec((tc, hw), lambda j: (j, 0)),
            compiler_params=cparams,
        )(x2d, gamma2d, beta2d)
        return out2d.reshape(n, c, h, w)

    # General N > 1 path (still free reshapes only).
    x3d = x_nchw.reshape(n, c, hw)
    out3d = pl.pallas_call(
        bn_relu_kernel_3d,
        out_shape=jax.ShapeDtypeStruct((n, c, hw), x3d.dtype),
        grid=grid,
        in_specs=[
            pl.BlockSpec((n, tc, hw), lambda j: (0, j, 0)),
            gb_spec,
            gb_spec,
        ],
        out_specs=pl.BlockSpec((n, tc, hw), lambda j: (0, j, 0)),
        compiler_params=cparams,
    )(x3d, gamma2d, beta2d)
    return out3d.reshape(n, c, h, w)


def reference(x_nchw, gamma, beta):
    mean = jnp.mean(x_nchw, axis=(0, 2, 3), keepdims=True)
    var = jnp.mean((x_nchw - mean) ** 2, axis=(0, 2, 3), keepdims=True)
    y = (x_nchw - mean) / jnp.sqrt(var + EPS)
    y = y * gamma.reshape(1, -1, 1, 1) + beta.reshape(1, -1, 1, 1)
    return jnp.maximum(y, 0.0)


if __name__ == "__main__":
    # Shapes consistent with the module: BatchNorm2d(512) on [1, 512, 28, 28].
    N, C, H, W = 1, 512, 28, 28
    key = jax.random.PRNGKey(0)
    kx, kg, kb = jax.random.split(key, 3)

    x = jax.random.normal(kx, (N, C, H, W), dtype=jnp.float32)
    # Deterministic non-trivial affine parameters to exercise the gamma/beta path.
    gamma = 1.0 + 0.1 * jax.random.normal(kg, (C,), dtype=jnp.float32)
    beta = 0.1 * jax.random.normal(kb, (C,), dtype=jnp.float32)

    out = jax.block_until_ready(batchnorm_relu(x, gamma, beta))

    ref = reference(x, gamma, beta)
    assert out.shape == (N, C, H, W)
    assert jnp.allclose(out, ref, atol=1e-4, rtol=1e-4), "mismatch vs reference"

    # TODO(synk): running_mean/running_var updates (momentum=0.1) are training
    # buffer side effects in PyTorch; they don't affect this forward output.
    print("KERNEL_OK")
</pallas_src>

<mosaic_0001>
module attributes {stable_mosaic.version = 11 : i64} {
  func.func @bn_relu_kernel_2d(%arg0: i32, %arg1: memref<256x784xf32, #tpu.memory_space<vmem>>, %arg2: memref<512x1xf32, #tpu.memory_space<vmem>>, %arg3: memref<512x1xf32, #tpu.memory_space<vmem>>, %arg4: memref<256x784xf32, #tpu.memory_space<vmem>>) attributes {dimension_semantics = [#tpu.dimension_semantics<parallel>], iteration_bounds = array<i64: 2>, scalar_prefetch = 0 : i64, scratch_operands = 0 : i64, tpu.core_type = #tpu.core_type<tc>, window_params = [{transform_indices = @transform_0, window_bounds = array<i64: 256, 784>}, {pipeline_mode = #tpu.pipeline_mode<synchronous>, transform_indices = @transform_1, window_bounds = array<i64: 512, 1>}, {pipeline_mode = #tpu.pipeline_mode<synchronous>, transform_indices = @transform_2, window_bounds = array<i64: 512, 1>}, {transform_indices = @transform_3, window_bounds = array<i64: 256, 784>}]} {
    %c0 = arith.constant 0 : index
    %c0_0 = arith.constant 0 : index
    %0 = vector.load %arg1[%c0, %c0_0] : memref<256x784xf32, #tpu.memory_space<vmem>>, vector<256x784xf32>
    %cst = arith.constant dense<0.000000e+00> : vector<256xf32>
    %1 = vector.multi_reduction <add>, %0, %cst [1] : vector<256x784xf32> to vector<256xf32>
    %2 = vector.shape_cast %1 : vector<256xf32> to vector<256x1xf32>
    %3 = arith.mulf %0, %0 : vector<256x784xf32>
    %cst_1 = arith.constant dense<0.000000e+00> : vector<256xf32>
    %4 = vector.multi_reduction <add>, %3, %cst_1 [1] : vector<256x784xf32> to vector<256xf32>
    %5 = vector.shape_cast %4 : vector<256xf32> to vector<256x1xf32>
    %cst_2 = arith.constant 0.00127551018 : f32
    %6 = vector.broadcast %cst_2 : f32 to vector<256x1xf32>
    %7 = arith.mulf %2, %6 : vector<256x1xf32>
    %cst_3 = arith.constant 0.00127551018 : f32
    %8 = vector.broadcast %cst_3 : f32 to vector<256x1xf32>
    %9 = arith.mulf %5, %8 : vector<256x1xf32>
    %10 = arith.mulf %7, %7 : vector<256x1xf32>
    %11 = arith.subf %9, %10 : vector<256x1xf32>
    %cst_4 = arith.constant 0.000000e+00 : f32
    %12 = vector.broadcast %cst_4 : f32 to vector<256x1xf32>
    %13 = arith.maximumf %11, %12 : vector<256x1xf32>
    %cst_5 = arith.constant 9.99999974E-6 : f32
    %14 = vector.broadcast %cst_5 : f32 to vector<256x1xf32>
    %15 = arith.addf %13, %14 : vector<256x1xf32>
    %16 = math.rsqrt %15 : vector<256x1xf32>
    %c256_i32 = arith.constant 256 : i32
    %17 = arith.muli %arg0, %c256_i32 : i32
    %18 = tpu.assume_multiple %17, 256 : i32
    %19 = arith.index_cast %18 : i32 to index
    %c0_6 = arith.constant 0 : index
    %20 = vector.load %arg2[%19, %c0_6] : memref<512x1xf32, #tpu.memory_space<vmem>>, vector<256x1xf32>
    %21 = arith.index_cast %18 : i32 to index
    %c0_7 = arith.constant 0 : index
    %22 = vector.load %arg3[%21, %c0_7] : memref<512x1xf32, #tpu.memory_space<vmem>>, vector<256x1xf32>
    %23 = arith.mulf %20, %16 : vector<256x1xf32>
    %24 = arith.mulf %7, %23 : vector<256x1xf32>
    %25 = arith.subf %22, %24 : vector<256x1xf32>
    %26 = vector.broadcast %23 : vector<256x1xf32> to vector<256x784xf32>
    %27 = arith.mulf %0, %26 : vector<256x784xf32>
    %28 = vector.broadcast %25 : vector<256x1xf32> to vector<256x784xf32>
    %29 = arith.addf %27, %28 : vector<256x784xf32>
    %cst_8 = arith.constant 0.000000e+00 : f32
    %30 = vector.broadcast %cst_8 : f32 to vector<256x784xf32>
    %31 = arith.maximumf %29, %30 : vector<256x784xf32>
    %c0_9 = arith.constant 0 : index
    %c0_10 = arith.constant 0 : index
    %32 = vector.load %arg4[%c0_9, %c0_10] : memref<256x784xf32, #tpu.memory_space<vmem>>, vector<256x784xf32>
    tpu.vector_store %arg4[%c0_9, %c0_10], %31 {strides = array<i32>} : memref<256x784xf32, #tpu.memory_space<vmem>>, vector<256x784xf32>,
    return
  }
  func.func @transform_0(%arg0: i32) -> (i32, i32) {
    %c0_i32 = arith.constant 0 : i32
    %c0_i32_0 = arith.constant 0 : i32
    return %arg0, %c0_i32 : i32, i32
  }
  func.func @transform_1(%arg0: i32) -> (i32, i32) {
    %c0_i32 = arith.constant 0 : i32
    %c0_i32_0 = arith.constant 0 : i32
    %c0_i32_1 = arith.constant 0 : i32
    return %c0_i32, %c0_i32_0 : i32, i32
  }
  func.func @transform_2(%arg0: i32) -> (i32, i32) {
    %c0_i32 = arith.constant 0 : i32
    %c0_i32_0 = arith.constant 0 : i32
    %c0_i32_1 = arith.constant 0 : i32
    return %c0_i32, %c0_i32_0 : i32, i32
  }
  func.func @transform_3(%arg0: i32) -> (i32, i32) {
    %c0_i32 = arith.constant 0 : i32
    %c0_i32_0 = arith.constant 0 : i32
    return %arg0, %c0_i32 : i32, i32
  }
}

</mosaic_0001>

<llo_original>
// kernel: tpu_custom_call.1
$region0: #{tpu_custom_call.1}
  #allocation0 [shape = 'u32[]', space=smem, size = 0x4, offset = 0x4, fixed_abs, tag = 'smem constant byte address 0x4 - core index']
  #allocation1 [shape = 'u32[144,128]{1,0:T(1,128)}', space=vmem, size = 0x12000, scoped, tag = 'internal scratch']
  %s0 = inlined_call_operand.vmem [shape: f32[512,784], index: 0, kind: input, shape index: {}]
  %s1 = inlined_call_operand.vmem [shape: f32[512,1], index: 1, kind: input, shape index: {}]
  %s2 = inlined_call_operand.vmem [shape: f32[512,1], index: 2, kind: input, shape index: {}]
  %s3 = inlined_call_operand.vmem [shape: f32[512,784], index: 3, kind: output, shape index: {}]
  %s4 = sld [smem:[#allocation0]]
  $region45: #{tpu_custom_call.1} parent=0
    _
  %s6 = ssub.s32 1, %s4
  %s7 = scalar_select 0, %s6, %s4
  loop: start=0, step=1, limit=4
  $region2: #{tpu_custom_call.1} parent=0 // loop_pre_header
    _
  $region3: #{tpu_custom_call.1} parent=0 // loop_header
    %s9 = sphi 0, %s13
    %p10 = scmp.ge.s32.totalorder %s9, 4
    %s19 = sphi 0, %s21
    %s22 = sphi 0, %s19
    %s23 = sphi 0, %s22
    %s39 = sphi 0, %s23
    %s43 = sphi 0, %s43
    %s45 = sphi 0, %s43
    %s46 = sphi 0, %s45
    %s60 = sphi 0, %s46
    %s64 = sphi 0, %s64
    %s66 = sphi 0, %s64
    %s67 = sphi 0, %s66
    %s81 = sphi 0, %s67
    %s87 = sphi 0, %s89
    %s90 = sphi 0, %s87
    %s91 = sphi 0, %s90
    %s107 = sphi 0, %s91
  $region4: #{tpu_custom_call.1} parent=0 // loop_header_branch
    %12 = sbr.rel (%p10) target = $region8
  $region5: #{tpu_custom_call.1} parent=0 // loop_body
    %s14 = ssub.s32 %s9, 1
    %s15 = ssub.s32 %s9, 2
    %s16 = sadd.s32 %s9, 1
    %s17 = ssub.s32 %s9, %s16
    %p18 = scmp.eq.s32.totalorder %s17, 0
    %s20 = sadd.s32 %s19, 1
    %s21 = scalar_select %p18, %s19, %s20
    %p24 = pneg %p18
    %p25 = scmp.eq.s32.totalorder %s9, 1
    %p26 = por %p24, %p25
    %p27 = scmp.ne.s32.totalorder %s19, %s22
    %p28 = scmp.eq.s32.totalorder %s9, 0
    %p29 = por %p27, %p28
    %p30 = scmp.ne.s32.totalorder %s19, %s22
    %p31 = scmp.eq.s32.totalorder %s14, 1
    %p32 = por %p30, %p31
    %p33 = scmp.ne.s32.totalorder %s22, %s23
    %p34 = scmp.eq.s32.totalorder %s14, 0
    %p35 = por %p33, %p34
    %p36 = scmp.ne.s32.totalorder %s22, %s23
    %p37 = scmp.eq.s32.totalorder %s15, 1
    %p38 = por %p36, %p37
    %p40 = scmp.ne.s32.totalorder %s23, %s39
    %p41 = scmp.eq.s32.totalorder %s15, 0
    %p42 = por %p40, %p41
    %s44 = sadd.s32 %s43, 1
    %p47 = scmp.eq.s32.totalorder %s9, 1
    %p48 = scmp.ne.s32.totalorder %s43, %s45
    %p49 = scmp.eq.s32.totalorder %s9, 0
    %p50 = por %p48, %p49
    %p51 = scmp.ne.s32.totalorder %s43, %s45
    %p52 = scmp.eq.s32.totalorder %s14, 1
    %p53 = por %p51, %p52
    %p54 = scmp.ne.s32.totalorder %s45, %s46
    %p55 = scmp.eq.s32.totalorder %s14, 0
    %p56 = por %p54, %p55
    %p57 = scmp.ne.s32.totalorder %s45, %s46
    %p58 = scmp.eq.s32.totalorder %s15, 1
    %p59 = por %p57, %p58
    %p61 = scmp.ne.s32.totalorder %s46, %s60
    %p62 = scmp.eq.s32.totalorder %s15, 0
    %p63 = por %p61, %p62
    %s65 = sadd.s32 %s64, 1
    %p68 = scmp.eq.s32.totalorder %s9, 1
    %p69 = scmp.ne.s32.totalorder %s64, %s66
    %p70 = scmp.eq.s32.totalorder %s9, 0
    %p71 = por %p69, %p70
    %p72 = scmp.ne.s32.totalorder %s64, %s66
    %p73 = scmp.eq.s32.totalorder %s14, 1
    %p74 = por %p72, %p73
    %p75 = scmp.ne.s32.totalorder %s66, %s67
    %p76 = scmp.eq.s32.totalorder %s14, 0
    %p77 = por %p75, %p76
    %p78 = scmp.ne.s32.totalorder %s66, %s67
    %p79 = scmp.eq.s32.totalorder %s15, 1
    %p80 = por %p78, %p79
    %p82 = scmp.ne.s32.totalorder %s67, %s81
    %p83 = scmp.eq.s32.totalorder %s15, 0
    %p84 = por %p82, %p83
    %s85 = ssub.s32 %s9, %s16
    %p86 = scmp.eq.s32.totalorder %s85, 0
    %s88 = sadd.s32 %s87, 1
    %s89 = scalar_select %p86, %s87, %s88
    %p92 = pneg %p86
    %p93 = scmp.eq.s32.totalorder %s9, 1
    %p94 = por %p92, %p93
    %p95 = scmp.ne.s32.totalorder %s87, %s90
    %p96 = scmp.eq.s32.totalorder %s9, 0
    %p97 = por %p95, %p96
    %p98 = scmp.ne.s32.totalorder %s87, %s90
    %p99 = scmp.eq.s32.totalorder %s14, 1
    %p100 = por %p98, %p99
    %p101 = scmp.ne.s32.totalorder %s90, %s91
    %p102 = scmp.eq.s32.totalorder %s14, 0
    %p103 = por %p101, %p102
    %p104 = scmp.ne.s32.totalorder %s90, %s91
    %p105 = scmp.eq.s32.totalorder %s15, 1
    %p106 = por %p104, %p105
    %p108 = scmp.ne.s32.totalorder %s91, %s107
    %p109 = scmp.eq.s32.totalorder %s15, 0
    %p110 = por %p108, %p109
    %p111 = scmp.le.s32.totalorder 1, %s9
    %p112 = scmp.lt.s32.totalorder %s9, 3
    %p113 = pnand %p111, %p112
    %p114 = pneg %p113
    // Predicated region
    $region9: #{tpu_custom_call.1} parent=5 // pred_check
      _
    $region10: #{tpu_custom_call.1} parent=5 // pred_check_branch
      %116 = sbr.rel (%p113) target = $region12
    $region11: #{tpu_custom_call.1} parent=5 // pred_region
      %s117 = ssub.s32 %s9, 1
      // Predicated region
      $region13: #{tpu_custom_call.1} parent=11 // pred_check
        %p118 = pneg %p56
      $region14: #{tpu_custom_call.1} parent=11 // pred_check_branch
        %120 = sbr.rel (%p118) target = $region16
      $region15: #{tpu_custom_call.1} parent=11 // pred_region
        _
      $region16: #{tpu_custom_call.1} parent=11 // pred_fallthru
        _
      // Predicated region
      $region17: #{tpu_custom_call.1} parent=11 // pred_check
        %p121 = pneg %p77
      $region18: #{tpu_custom_call.1} parent=11 // pred_check_branch
        %123 = sbr.rel (%p121) target = $region20
      $region19: #{tpu_custom_call.1} parent=11 // pred_region
        _
      $region20: #{tpu_custom_call.1} parent=11 // pred_fallthru
        _
    $region12: #{tpu_custom_call.1} parent=5 // pred_fallthru
      _
    %p124 = scmp.lt.s32.totalorder %s9, 2
    // Predicated region
    $region21: #{tpu_custom_call.1} parent=5 // pred_check
      %p125 = pneg %p124
    $region22: #{tpu_custom_call.1} parent=5 // pred_check_branch
      %127 = sbr.rel (%p125) target = $region24
    $region23: #{tpu_custom_call.1} parent=5 // pred_region
      // Predicated region
      $region25: #{tpu_custom_call.1} parent=23 // pred_check
        %p128 = pneg %p29
      $region26: #{tpu_custom_call.1} parent=23 // pred_check_branch
        %130 = sbr.rel (%p128) target = $region28
      $region27: #{tpu_custom_call.1} parent=23 // pred_region
        %s131 = smul.u32 32, %s9
        %p132 = scmp.lt.s32.totalorder %s131, 63
        %s133 = scalar_select %p132, %s131, 63
        %s134 = smul.addr %s133, 7
        %s135 = smul.addr %s134, 8
        %s136 = scalar_lea.vmem %s0, %s135
        %s137 = smul.u32 32, %s9
      $region28: #{tpu_custom_call.1} parent=23 // pred_fallthru
        _
    $region24: #{tpu_custom_call.1} parent=5 // pred_fallthru
      _
    %p138 = scmp.le.s32.totalorder 1, %s9
    %p139 = scmp.lt.s32.totalorder %s9, 3
    %p140 = pnand %p138, %p139
    %p141 = pneg %p140
    // Predicated region
    $region29: #{tpu_custom_call.1} parent=5 // pred_check
      _
    $region30: #{tpu_custom_call.1} parent=5 // pred_check_branch
      %143 = sbr.rel (%p140) target = $region32
    $region31: #{tpu_custom_call.1} parent=5 // pred_region
      %s144 = ssub.s32 %s9, 1
      %s145 = smul.u32 32, %s14
      %p146 = scmp.lt.s32.totalorder %s145, 63
      %s147 = scalar_select %p146, %s145, 63
      %s148 = smul.addr %s147, 7
      %s149 = smul.addr %s148, 8
      %s150 = scalar_lea.vmem %s0, %s149
      %p151 = pneg %p35
      %p152 = pneg %p32
      %p153 = pneg %p56
      %p154 = pneg %p53
      %p155 = pneg %p77
      %p156 = pneg %p74
      %p157 = pneg %p103
      %p158 = pneg %p100
      %s159 = smul.u32 32, %s14
      %p160 = scmp.lt.s32.totalorder %s159, 63
      %s161 = scalar_select %p160, %s159, 63
      %s162 = smul.addr %s161, 7
      %s163 = smul.addr %s162, 8
      %s164 = scalar_lea.vmem %s3, %s163
      %s165 = smul.u32 32, %s14
      %p166 = scmp.lt.s32.totalorder %s165, 63
      %s167 = scalar_select %p166, %s165, 63
      %s168 = smul.addr %s167, 7
      %s169 = smul.addr %s168, 8
      %s170 = scalar_lea.vmem %s0, %s169
      %s171 = smul.u32 32, %s14
      %s172 = smul.u32 32, %s14
      %p173 = scmp.lt.s32.totalorder %s172, 63
      %s174 = scalar_select %p173, %s172, 63
      %s175 = smul.addr %s174, 7
      %s176 = smul.addr %s175, 8
      %s177 = scalar_lea.vmem %s3, %s176
      %s178 = smul.u32 32, %s14
      %v179 = vld [vmem:[%s170] sm:$0xff]
      %v180 = vld [vmem:[%s170 + $0x8] sm:$0xff]
      %v181 = vld [vmem:[%s170 + $0x10] sm:$0xff]
      %v182 = vld [vmem:[%s170 + $0x18] sm:$0xff]
      %v183 = vld [vmem:[%s170 + $0x20] sm:$0xff]
      %v184 = vld [vmem:[%s170 + $0x28] sm:$0xff]
      %v185 = vld [vmem:[%s170 + $0x30] sm:$0xff]
      %v186 = vld [vmem:[%s170 + $0x38] sm:$0xff]
      %v187 = vld [vmem:[%s170 + $0x40] sm:$0xff]
      %v188 = vld [vmem:[%s170 + $0x48] sm:$0xff]
      %v189 = vld [vmem:[%s170 + $0x50] sm:$0xff]
      %v190 = vld [vmem:[%s170 + $0x58] sm:$0xff]
      %v191 = vld [vmem:[%s170 + $0x60] sm:$0xff]
      %v192 = vld [vmem:[%s170 + $0x68] sm:$0xff]
      %v193 = vld [vmem:[%s170 + $0x70] sm:$0xff]
      %v194 = vld [vmem:[%s170 + $0x78] sm:$0xff]
      %v195 = vld [vmem:[%s170 + $0x80] sm:$0xff]
      %v196 = vld [vmem:[%s170 + $0x88] sm:$0xff]
      %v197 = vld [vmem:[%s170 + $0x90] sm:$0xff]
      %v198 = vld [vmem:[%s170 + $0x98] sm:$0xff]
      %v199 = vld [vmem:[%s170 + $0xa0] sm:$0xff]
      %v200 = vld [vmem:[%s170 + $0xa8] sm:$0xff]
      %v201 = vld [vmem:[%s170 + $0xb0] sm:$0xff]
      %v202 = vld [vmem:[%s170 + $0xb8] sm:$0xff]
      %v203 = vld [vmem:[%s170 + $0xc0] sm:$0xff]
      %v204 = vld [vmem:[%s170 + $0xc8] sm:$0xff]
      %v205 = vld [vmem:[%s170 + $0xd0] sm:$0xff]
      %v206 = vld [vmem:[%s170 + $0xd8] sm:$0xff]
      %v207 = vld [vmem:[%s170 + $0xe0] sm:$0xff]
      %v208 = vld [vmem:[%s170 + $0xe8] sm:$0xff]
      %v209 = vld [vmem:[%s170 + $0xf0] sm:$0xff]
      %v210 = vld [vmem:[%s170 + $0xf8] sm:$0xff]
      %v211 = vld [vmem:[%s170 + $0x100] sm:$0xff]
      %v212 = vld [vmem:[%s170 + $0x108] sm:$0xff]
      %v213 = vld [vmem:[%s170 + $0x110] sm:$0xff]
      %v214 = vld [vmem:[%s170 + $0x118] sm:$0xff]
      %v215 = vld [vmem:[%s170 + $0x120] sm:$0xff]
      %v216 = vld [vmem:[%s170 + $0x128] sm:$0xff]
      %v217 = vld [vmem:[%s170 + $0x130] sm:$0xff]
      %v218 = vld [vmem:[%s170 + $0x138] sm:$0xff]
      %v219 = vld [vmem:[%s170 + $0x140] sm:$0xff]
      %v220 = vld [vmem:[%s170 + $0x148] sm:$0xff]
      %v221 = vld [vmem:[%s170 + $0x150] sm:$0xff]
      %v222 = vld [vmem:[%s170 + $0x158] sm:$0xff]
      %v223 = vld [vmem:[%s170 + $0x160] sm:$0xff]
      %v224 = vld [vmem:[%s170 + $0x168] sm:$0xff]
      %v225 = vld [vmem:[%s170 + $0x170] sm:$0xff]
      %v226 = vld [vmem:[%s170 + $0x178] sm:$0xff]
      %v227 = vld [vmem:[%s170 + $0x180] sm:$0xff]
      %v228 = vld [vmem:[%s170 + $0x188] sm:$0xff]
      %v229 = vld [vmem:[%s170 + $0x190] sm:$0xff]
      %v230 = vld [vmem:[%s170 + $0x198] sm:$0xff]
      %v231 = vld [vmem:[%s170 + $0x1a0] sm:$0xff]
      %v232 = vld [vmem:[%s170 + $0x1a8] sm:$0xff]
      %v233 = vld [vmem:[%s170 + $0x1b0] sm:$0xff]
      %v234 = vld [vmem:[%s170 + $0x1b8] sm:$0xff]
      %v235 = vld [vmem:[%s170 + $0x1c0] sm:$0xff]
      %v236 = vld [vmem:[%s170 + $0x1c8] sm:$0xff]
      %v237 = vld [vmem:[%s170 + $0x1d0] sm:$0xff]
      %v238 = vld [vmem:[%s170 + $0x1d8] sm:$0xff]
      %v239 = vld [vmem:[%s170 + $0x1e0] sm:$0xff]
      %v240 = vld [vmem:[%s170 + $0x1e8] sm:$0xff]
      %v241 = vld [vmem:[%s170 + $0x1f0] sm:$0xff]
      %v242 = vld [vmem:[%s170 + $0x1f8] sm:$0xff]
      %v243 = vld [vmem:[%s170 + $0x200] sm:$0xff]
      %v244 = vld [vmem:[%s170 + $0x208] sm:$0xff]
      %v245 = vld [vmem:[%s170 + $0x210] sm:$0xff]
      %v246 = vld [vmem:[%s170 + $0x218] sm:$0xff]
      %v247 = vld [vmem:[%s170 + $0x220] sm:$0xff]
      %v248 = vld [vmem:[%s170 + $0x228] sm:$0xff]
      %v249 = vld [vmem:[%s170 + $0x230] sm:$0xff]
      %v250 = vld [vmem:[%s170 + $0x238] sm:$0xff]
      %v251 = vld [vmem:[%s170 + $0x240] sm:$0xff]
      %v252 = vld [vmem:[%s170 + $0x248] sm:$0xff]
      %v253 = vld [vmem:[%s170 + $0x250] sm:$0xff]
      %v254 = vld [vmem:[%s170 + $0x258] sm:$0xff]
      %v255 = vld [vmem:[%s170 + $0x260] sm:$0xff]
      %v256 = vld [vmem:[%s170 + $0x268] sm:$0xff]
      %v257 = vld [vmem:[%s170 + $0x270] sm:$0xff]
      %v258 = vld [vmem:[%s170 + $0x278] sm:$0xff]
      %v259 = vld [vmem:[%s170 + $0x280] sm:$0xff]
      %v260 = vld [vmem:[%s170 + $0x288] sm:$0xff]
      %v261 = vld [vmem:[%s170 + $0x290] sm:$0xff]
      %v262 = vld [vmem:[%s170 + $0x298] sm:$0xff]
      %v263 = vld [vmem:[%s170 + $0x2a0] sm:$0xff]
      %v264 = vld [vmem:[%s170 + $0x2a8] sm:$0xff]
      %v265 = vld [vmem:[%s170 + $0x2b0] sm:$0xff]
      %v266 = vld [vmem:[%s170 + $0x2b8] sm:$0xff]
      %v267 = vld [vmem:[%s170 + $0x2c0] sm:$0xff]
      %v268 = vld [vmem:[%s170 + $0x2c8] sm:$0xff]
      %v269 = vld [vmem:[%s170 + $0x2d0] sm:$0xff]
      %v270 = vld [vmem:[%s170 + $0x2d8] sm:$0xff]
      %v271 = vld [vmem:[%s170 + $0x2e0] sm:$0xff]
      %v272 = vld [vmem:[%s170 + $0x2e8] sm:$0xff]
      %v273 = vld [vmem:[%s170 + $0x2f0] sm:$0xff]
      %v274 = vld [vmem:[%s170 + $0x2f8] sm:$0xff]
      %v275 = vld [vmem:[%s170 + $0x300] sm:$0xff]
      %v276 = vld [vmem:[%s170 + $0x308] sm:$0xff]
      %v277 = vld [vmem:[%s170 + $0x310] sm:$0xff]
      %v278 = vld [vmem:[%s170 + $0x318] sm:$0xff]
      %v279 = vld [vmem:[%s170 + $0x320] sm:$0xff]
      %v280 = vld [vmem:[%s170 + $0x328] sm:$0xff]
      %v281 = vld [vmem:[%s170 + $0x330] sm:$0xff]
      %v282 = vld [vmem:[%s170 + $0x338] sm:$0xff]
      %v283 = vld [vmem:[%s170 + $0x340] sm:$0xff]
      %v284 = vld [vmem:[%s170 + $0x348] sm:$0xff]
      %v285 = vld [vmem:[%s170 + $0x350] sm:$0xff]
      %v286 = vld [vmem:[%s170 + $0x358] sm:$0xff]
      %v287 = vld [vmem:[%s170 + $0x360] sm:$0xff]
      %v288 = vld [vmem:[%s170 + $0x368] sm:$0xff]
      %v289 = vld [vmem:[%s170 + $0x370] sm:$0xff]
      %v290 = vld [vmem:[%s170 + $0x378] sm:$0xff]
      %v291 = vld [vmem:[%s170 + $0x380] sm:$0xff]
      %v292 = vld [vmem:[%s170 + $0x388] sm:$0xff]
      %v293 = vld [vmem:[%s170 + $0x390] sm:$0xff]
      %v294 = vld [vmem:[%s170 + $0x398] sm:$0xff]
      %v295 = vld [vmem:[%s170 + $0x3a0] sm:$0xff]
      %v296 = vld [vmem:[%s170 + $0x3a8] sm:$0xff]
      %v297 = vld [vmem:[%s170 + $0x3b0] sm:$0xff]
      %v298 = vld [vmem:[%s170 + $0x3b8] sm:$0xff]
      %v299 = vld [vmem:[%s170 + $0x3c0] sm:$0xff]
      %v300 = vld [vmem:[%s170 + $0x3c8] sm:$0xff]
      %v301 = vld [vmem:[%s170 + $0x3d0] sm:$0xff]
      %v302 = vld [vmem:[%s170 + $0x3d8] sm:$0xff]
      %v303 = vld [vmem:[%s170 + $0x3e0] sm:$0xff]
      %v304 = vld [vmem:[%s170 + $0x3e8] sm:$0xff]
      %v305 = vld [vmem:[%s170 + $0x3f0] sm:$0xff]
      %v306 = vld [vmem:[%s170 + $0x3f8] sm:$0xff]
      %v307 = vld [vmem:[%s170 + $0x400] sm:$0xff]
      %v308 = vld [vmem:[%s170 + $0x408] sm:$0xff]
      %v309 = vld [vmem:[%s170 + $0x410] sm:$0xff]
      %v310 = vld [vmem:[%s170 + $0x418] sm:$0xff]
      %v311 = vld [vmem:[%s170 + $0x420] sm:$0xff]
      %v312 = vld [vmem:[%s170 + $0x428] sm:$0xff]
      %v313 = vld [vmem:[%s170 + $0x430] sm:$0xff]
      %v314 = vld [vmem:[%s170 + $0x438] sm:$0xff]
      %v315 = vld [vmem:[%s170 + $0x440] sm:$0xff]
      %v316 = vld [vmem:[%s170 + $0x448] sm:$0xff]
      %v317 = vld [vmem:[%s170 + $0x450] sm:$0xff]
      %v318 = vld [vmem:[%s170 + $0x458] sm:$0xff]
      %v319 = vld [vmem:[%s170 + $0x460] sm:$0xff]
      %v320 = vld [vmem:[%s170 + $0x468] sm:$0xff]
      %v321 = vld [vmem:[%s170 + $0x470] sm:$0xff]
      %v322 = vld [vmem:[%s170 + $0x478] sm:$0xff]
      %v323 = vld [vmem:[%s170 + $0x480] sm:$0xff]
      %v324 = vld [vmem:[%s170 + $0x488] sm:$0xff]
      %v325 = vld [vmem:[%s170 + $0x490] sm:$0xff]
      %v326 = vld [vmem:[%s170 + $0x498] sm:$0xff]
      %v327 = vld [vmem:[%s170 + $0x4a0] sm:$0xff]
      %v328 = vld [vmem:[%s170 + $0x4a8] sm:$0xff]
      %v329 = vld [vmem:[%s170 + $0x4b0] sm:$0xff]
      %v330 = vld [vmem:[%s170 + $0x4b8] sm:$0xff]
      %v331 = vld [vmem:[%s170 + $0x4c0] sm:$0xff]
      %v332 = vld [vmem:[%s170 + $0x4c8] sm:$0xff]
      %v333 = vld [vmem:[%s170 + $0x4d0] sm:$0xff]
      %v334 = vld [vmem:[%s170 + $0x4d8] sm:$0xff]
      %v335 = vld [vmem:[%s170 + $0x4e0] sm:$0xff]
      %v336 = vld [vmem:[%s170 + $0x4e8] sm:$0xff]
      %v337 = vld [vmem:[%s170 + $0x4f0] sm:$0xff]
      %v338 = vld [vmem:[%s170 + $0x4f8] sm:$0xff]
      %v339 = vld [vmem:[%s170 + $0x500] sm:$0xff]
      %v340 = vld [vmem:[%s170 + $0x508] sm:$0xff]
      %v341 = vld [vmem:[%s170 + $0x510] sm:$0xff]
      %v342 = vld [vmem:[%s170 + $0x518] sm:$0xff]
      %v343 = vld [vmem:[%s170 + $0x520] sm:$0xff]
      %v344 = vld [vmem:[%s170 + $0x528] sm:$0xff]
      %v345 = vld [vmem:[%s170 + $0x530] sm:$0xff]
      %v346 = vld [vmem:[%s170 + $0x538] sm:$0xff]
      %v347 = vld [vmem:[%s170 + $0x540] sm:$0xff]
      %v348 = vld [vmem:[%s170 + $0x548] sm:$0xff]
      %v349 = vld [vmem:[%s170 + $0x550] sm:$0xff]
      %v350 = vld [vmem:[%s170 + $0x558] sm:$0xff]
      %v351 = vld [vmem:[%s170 + $0x560] sm:$0xff]
      %v352 = vld [vmem:[%s170 + $0x568] sm:$0xff]
      %v353 = vld [vmem:[%s170 + $0x570] sm:$0xff]
      %v354 = vld [vmem:[%s170 + $0x578] sm:$0xff]
      %v355 = vld [vmem:[%s170 + $0x580] sm:$0xff]
      %v356 = vld [vmem:[%s170 + $0x588] sm:$0xff]
      %v357 = vld [vmem:[%s170 + $0x590] sm:$0xff]
      %v358 = vld [vmem:[%s170 + $0x598] sm:$0xff]
      %v359 = vld [vmem:[%s170 + $0x5a0] sm:$0xff]
      %v360 = vld [vmem:[%s170 + $0x5a8] sm:$0xff]
      %v361 = vld [vmem:[%s170 + $0x5b0] sm:$0xff]
      %v362 = vld [vmem:[%s170 + $0x5b8] sm:$0xff]
      %v363 = vld [vmem:[%s170 + $0x5c0] sm:$0xff]
      %v364 = vld [vmem:[%s170 + $0x5c8] sm:$0xff]
      %v365 = vld [vmem:[%s170 + $0x5d0] sm:$0xff]
      %v366 = vld [vmem:[%s170 + $0x5d8] sm:$0xff]
      %v367 = vld [vmem:[%s170 + $0x5e0] sm:$0xff]
      %v368 = vld [vmem:[%s170 + $0x5e8] sm:$0xff]
      %v369 = vld [vmem:[%s170 + $0x5f0] sm:$0xff]
      %v370 = vld [vmem:[%s170 + $0x5f8] sm:$0xff]
      %v371 = vld [vmem:[%s170 + $0x600] sm:$0xff]
      %v372 = vld [vmem:[%s170 + $0x608] sm:$0xff]
      %v373 = vld [vmem:[%s170 + $0x610] sm:$0xff]
      %v374 = vld [vmem:[%s170 + $0x618] sm:$0xff]
      %v375 = vld [vmem:[%s170 + $0x620] sm:$0xff]
      %v376 = vld [vmem:[%s170 + $0x628] sm:$0xff]
      %v377 = vld [vmem:[%s170 + $0x630] sm:$0xff]
      %v378 = vld [vmem:[%s170 + $0x638] sm:$0xff]
      %v379 = vld [vmem:[%s170 + $0x640] sm:$0xff]
      %v380 = vld [vmem:[%s170 + $0x648] sm:$0xff]
      %v381 = vld [vmem:[%s170 + $0x650] sm:$0xff]
      %v382 = vld [vmem:[%s170 + $0x658] sm:$0xff]
      %v383 = vld [vmem:[%s170 + $0x660] sm:$0xff]
      %v384 = vld [vmem:[%s170 + $0x668] sm:$0xff]
      %v385 = vld [vmem:[%s170 + $0x670] sm:$0xff]
      %v386 = vld [vmem:[%s170 + $0x678] sm:$0xff]
      %v387 = vld [vmem:[%s170 + $0x680] sm:$0xff]
      %v388 = vld [vmem:[%s170 + $0x688] sm:$0xff]
      %v389 = vld [vmem:[%s170 + $0x690] sm:$0xff]
      %v390 = vld [vmem:[%s170 + $0x698] sm:$0xff]
      %v391 = vld [vmem:[%s170 + $0x6a0] sm:$0xff]
      %v392 = vld [vmem:[%s170 + $0x6a8] sm:$0xff]
      %v393 = vld [vmem:[%s170 + $0x6b0] sm:$0xff]
      %v394 = vld [vmem:[%s170 + $0x6b8] sm:$0xff]
      %v395 = vld [vmem:[%s170 + $0x6c0] sm:$0xff]
      %v396 = vld [vmem:[%s170 + $0x6c8] sm:$0xff]
      %v397 = vld [vmem:[%s170 + $0x6d0] sm:$0xff]
      %v398 = vld [vmem:[%s170 + $0x6d8] sm:$0xff]
      %v399 = vld [vmem:[%s170 + $0x6e0] sm:$0xff]
      %v400 = vld [vmem:[%s170 + $0x6e8] sm:$0xff]
      %v401 = vld [vmem:[%s170 + $0x6f0] sm:$0xff]
      %v402 = vld [vmem:[%s170 + $0x6f8] sm:$0xff]
      %v403 = vadd.f32 %v179, %v180
      %v404 = vadd.f32 %v403, %v181
      %v405 = vadd.f32 %v404, %v182
      %v406 = vadd.f32 %v405, %v183
      %v407 = vadd.f32 %v406, %v184
      %vm408 = vcmask 130048
      %v409 = vsel %vm408, %v185, 0.0
      %v410 = vadd.f32 %v407, %v409
      %411 = vadd.xlane.f32.xlu0 %v410
      %v412 = vpop.xlane.xlu0 %411
      %v413 = vadd.f32 %v186, %v187
      %v414 = vadd.f32 %v413, %v188
      %v415 = vadd.f32 %v414, %v189
      %v416 = vadd.f32 %v415, %v190
      %v417 = vadd.f32 %v416, %v191
      %v418 = vsel %vm408, %v192, 0.0
      %v419 = vadd.f32 %v417, %v418
      %420 = vadd.xlane.f32.xlu0 %v419
      %v421 = vpop.xlane.xlu0 %420
      %v422 = vadd.f32 %v193, %v194
      %v423 = vadd.f32 %v422, %v195
      %v424 = vadd.f32 %v423, %v196
      %v425 = vadd.f32 %v424, %v197
      %v426 = vadd.f32 %v425, %v198
      %v427 = vsel %vm408, %v199, 0.0
      %v428 = vadd.f32 %v426, %v427
      %429 = vadd.xlane.f32.xlu0 %v428
      %v430 = vpop.xlane.xlu0 %429
      %v431 = vadd.f32 %v200, %v201
      %v432 = vadd.f32 %v431, %v202
      %v433 = vadd.f32 %v432, %v203
      %v434 = vadd.f32 %v433, %v204
      %v435 = vadd.f32 %v434, %v205
      %v436 = vsel %vm408, %v206, 0.0
      %v437 = vadd.f32 %v435, %v436
      %438 = vadd.xlane.f32.xlu0 %v437
      %v439 = vpop.xlane.xlu0 %438
      %v440 = vadd.f32 %v207, %v208
      %v441 = vadd.f32 %v440, %v209
      %v442 = vadd.f32 %v441, %v210
      %v443 = vadd.f32 %v442, %v211
      %v444 = vadd.f32 %v443, %v212
      %v445 = vsel %vm408, %v213, 0.0
      %v446 = vadd.f32 %v444, %v445
      %447 = vadd.xlane.f32.xlu0 %v446
      %v448 = vpop.xlane.xlu0 %447
      %v449 = vadd.f32 %v214, %v215
      %v450 = vadd.f32 %v449, %v216
      %v451 = vadd.f32 %v450, %v217
      %v452 = vadd.f32 %v451, %v218
      %v453 = vadd.f32 %v452, %v219
      %v454 = vsel %vm408, %v220, 0.0
      %v455 = vadd.f32 %v453, %v454
      %456 = vadd.xlane.f32.xlu0 %v455
      %v457 = vpop.xlane.xlu0 %456
      %v458 = vadd.f32 %v221, %v222
      %v459 = vadd.f32 %v458, %v223
      %v460 = vadd.f32 %v459, %v224
      %v461 = vadd.f32 %v460, %v225
      %v462 = vadd.f32 %v461, %v226
      %v463 = vsel %vm408, %v227, 0.0
      %v464 = vadd.f32 %v462, %v463
      %465 = vadd.xlane.f32.xlu0 %v464
      %v466 = vpop.xlane.xlu0 %465
      %v467 = vadd.f32 %v228, %v229
      %v468 = vadd.f32 %v467, %v230
      %v469 = vadd.f32 %v468, %v231
      %v470 = vadd.f32 %v469, %v232
      %v471 = vadd.f32 %v470, %v233
      %v472 = vsel %vm408, %v234, 0.0
      %v473 = vadd.f32 %v471, %v472
      %474 = vadd.xlane.f32.xlu0 %v473
      %v475 = vpop.xlane.xlu0 %474
      %v476 = vadd.f32 %v235, %v236
      %v477 = vadd.f32 %v476, %v237
      %v478 = vadd.f32 %v477, %v238
      %v479 = vadd.f32 %v478, %v239
      %v480 = vadd.f32 %v479, %v240
      %v481 = vsel %vm408, %v241, 0.0
      %v482 = vadd.f32 %v480, %v481
      %483 = vadd.xlane.f32.xlu0 %v482
      %v484 = vpop.xlane.xlu0 %483
      %v485 = vadd.f32 %v242, %v243
      %v486 = vadd.f32 %v485, %v244
      %v487 = vadd.f32 %v486, %v245
      %v488 = vadd.f32 %v487, %v246
      %v489 = vadd.f32 %v488, %v247
      %v490 = vsel %vm408, %v248, 0.0
      %v491 = vadd.f32 %v489, %v490
      %492 = vadd.xlane.f32.xlu0 %v491
      %v493 = vpop.xlane.xlu0 %492
      %v494 = vadd.f32 %v249, %v250
      %v495 = vadd.f32 %v494, %v251
      %v496 = vadd.f32 %v495, %v252
      %v497 = vadd.f32 %v496, %v253
      %v498 = vadd.f32 %v497, %v254
      %v499 = vsel %vm408, %v255, 0.0
      %v500 = vadd.f32 %v498, %v499
      %501 = vadd.xlane.f32.xlu0 %v500
      %v502 = vpop.xlane.xlu0 %501
      %v503 = vadd.f32 %v256, %v257
      %v504 = vadd.f32 %v503, %v258
      %v505 = vadd.f32 %v504, %v259
      %v506 = vadd.f32 %v505, %v260
      %v507 = vadd.f32 %v506, %v261
      %v508 = vsel %vm408, %v262, 0.0
      %v509 = vadd.f32 %v507, %v508
      %510 = vadd.xlane.f32.xlu0 %v509
      %v511 = vpop.xlane.xlu0 %510
      %v512 = vadd.f32 %v263, %v264
      %v513 = vadd.f32 %v512, %v265
      %v514 = vadd.f32 %v513, %v266
      %v515 = vadd.f32 %v514, %v267
      %v516 = vadd.f32 %v515, %v268
      %v517 = vsel %vm408, %v269, 0.0
      %v518 = vadd.f32 %v516, %v517
      %519 = vadd.xlane.f32.xlu0 %v518
      %v520 = vpop.xlane.xlu0 %519
      %v521 = vadd.f32 %v270, %v271
      %v522 = vadd.f32 %v521, %v272
      %v523 = vadd.f32 %v522, %v273
      %v524 = vadd.f32 %v523, %v274
      %v525 = vadd.f32 %v524, %v275
      %v526 = vsel %vm408, %v276, 0.0
      %v527 = vadd.f32 %v525, %v526
      %528 = vadd.xlane.f32.xlu0 %v527
      %v529 = vpop.xlane.xlu0 %528
      %v530 = vadd.f32 %v277, %v278
      %v531 = vadd.f32 %v530, %v279
      %v532 = vadd.f32 %v531, %v280
      %v533 = vadd.f32 %v532, %v281
      %v534 = vadd.f32 %v533, %v282
      %v535 = vsel %vm408, %v283, 0.0
      %v536 = vadd.f32 %v534, %v535
      %537 = vadd.xlane.f32.xlu0 %v536
      %v538 = vpop.xlane.xlu0 %537
      %v539 = vadd.f32 %v284, %v285
      %v540 = vadd.f32 %v539, %v286
      %v541 = vadd.f32 %v540, %v287
      %v542 = vadd.f32 %v541, %v288
      %v543 = vadd.f32 %v542, %v289
      %v544 = vsel %vm408, %v290, 0.0
      %v545 = vadd.f32 %v543, %v544
      %546 = vadd.xlane.f32.xlu0 %v545
      %v547 = vpop.xlane.xlu0 %546
      %v548 = vadd.f32 %v291, %v292
      %v549 = vadd.f32 %v548, %v293
      %v550 = vadd.f32 %v549, %v294
      %v551 = vadd.f32 %v550, %v295
      %v552 = vadd.f32 %v551, %v296
      %v553 = vsel %vm408, %v297, 0.0
      %v554 = vadd.f32 %v552, %v553
      %555 = vadd.xlane.f32.xlu0 %v554
      %v556 = vpop.xlane.xlu0 %555
      %v557 = vadd.f32 %v298, %v299
      %v558 = vadd.f32 %v557, %v300
      %v559 = vadd.f32 %v558, %v301
      %v560 = vadd.f32 %v559, %v302
      %v561 = vadd.f32 %v560, %v303
      %v562 = vsel %vm408, %v304, 0.0
      %v563 = vadd.f32 %v561, %v562
      %564 = vadd.xlane.f32.xlu0 %v563
      %v565 = vpop.xlane.xlu0 %564
      %v566 = vadd.f32 %v305, %v306
      %v567 = vadd.f32 %v566, %v307
      %v568 = vadd.f32 %v567, %v308
      %v569 = vadd.f32 %v568, %v309
      %v570 = vadd.f32 %v569, %v310
      %v571 = vsel %vm408, %v311, 0.0
      %v572 = vadd.f32 %v570, %v571
      %573 = vadd.xlane.f32.xlu0 %v572
      %v574 = vpop.xlane.xlu0 %573
      %v575 = vadd.f32 %v312, %v313
      %v576 = vadd.f32 %v575, %v314
      %v577 = vadd.f32 %v576, %v315
      %v578 = vadd.f32 %v577, %v316
      %v579 = vadd.f32 %v578, %v317
      %v580 = vsel %vm408, %v318, 0.0
      %v581 = vadd.f32 %v579, %v580
      %582 = vadd.xlane.f32.xlu0 %v581
      %v583 = vpop.xlane.xlu0 %582
      %v584 = vadd.f32 %v319, %v320
      %v585 = vadd.f32 %v584, %v321
      %v586 = vadd.f32 %v585, %v322
      %v587 = vadd.f32 %v586, %v323
      %v588 = vadd.f32 %v587, %v324
      %v589 = vsel %vm408, %v325, 0.0
      %v590 = vadd.f32 %v588, %v589
      %591 = vadd.xlane.f32.xlu0 %v590
      %v592 = vpop.xlane.xlu0 %591
      %v593 = vadd.f32 %v326, %v327
      %v594 = vadd.f32 %v593, %v328
      %v595 = vadd.f32 %v594, %v329
      %v596 = vadd.f32 %v595, %v330
      %v597 = vadd.f32 %v596, %v331
      %v598 = vsel %vm408, %v332, 0.0
      %v599 = vadd.f32 %v597, %v598
      %600 = vadd.xlane.f32.xlu0 %v599
      %v601 = vpop.xlane.xlu0 %600
      %v602 = vadd.f32 %v333, %v334
      %v603 = vadd.f32 %v602, %v335
      %v604 = vadd.f32 %v603, %v336
      %v605 = vadd.f32 %v604, %v337
      %v606 = vadd.f32 %v605, %v338
      %v607 = vsel %vm408, %v339, 0.0
      %v608 = vadd.f32 %v606, %v607
      %609 = vadd.xlane.f32.xlu0 %v608
      %v610 = vpop.xlane.xlu0 %609
      %v611 = vadd.f32 %v340, %v341
      %v612 = vadd.f32 %v611, %v342
      %v613 = vadd.f32 %v612, %v343
      %v614 = vadd.f32 %v613, %v344
      %v615 = vadd.f32 %v614, %v345
      %v616 = vsel %vm408, %v346, 0.0
      %v617 = vadd.f32 %v615, %v616
      %618 = vadd.xlane.f32.xlu0 %v617
      %v619 = vpop.xlane.xlu0 %618
      %v620 = vadd.f32 %v347, %v348
      %v621 = vadd.f32 %v620, %v349
      %v622 = vadd.f32 %v621, %v350
      %v623 = vadd.f32 %v622, %v351
      %v624 = vadd.f32 %v623, %v352
      %v625 = vsel %vm408, %v353, 0.0
      %v626 = vadd.f32 %v624, %v625
      %627 = vadd.xlane.f32.xlu0 %v626
      %v628 = vpop.xlane.xlu0 %627
      %v629 = vadd.f32 %v354, %v355
      %v630 = vadd.f32 %v629, %v356
      %v631 = vadd.f32 %v630, %v357
      %v632 = vadd.f32 %v631, %v358
      %v633 = vadd.f32 %v632, %v359
      %v634 = vsel %vm408, %v360, 0.0
      %v635 = vadd.f32 %v633, %v634
      %636 = vadd.xlane.f32.xlu0 %v635
      %v637 = vpop.xlane.xlu0 %636
      %v638 = vadd.f32 %v361, %v362
      %v639 = vadd.f32 %v638, %v363
      %v640 = vadd.f32 %v639, %v364
      %v641 = vadd.f32 %v640, %v365
      %v642 = vadd.f32 %v641, %v366
      %v643 = vsel %vm408, %v367, 0.0
      %v644 = vadd.f32 %v642, %v643
      %645 = vadd.xlane.f32.xlu0 %v644
      %v646 = vpop.xlane.xlu0 %645
      %v647 = vadd.f32 %v368, %v369
      %v648 = vadd.f32 %v647, %v370
      %v649 = vadd.f32 %v648, %v371
      %v650 = vadd.f32 %v649, %v372
      %v651 = vadd.f32 %v650, %v373
      %v652 = vsel %vm408, %v374, 0.0
      %v653 = vadd.f32 %v651, %v652
      %654 = vadd.xlane.f32.xlu0 %v653
      %v655 = vpop.xlane.xlu0 %654
      %v656 = vadd.f32 %v375, %v376
      %v657 = vadd.f32 %v656, %v377
      %v658 = vadd.f32 %v657, %v378
      %v659 = vadd.f32 %v658, %v379
      %v660 = vadd.f32 %v659, %v380
      %v661 = vsel %vm408, %v381, 0.0
      %v662 = vadd.f32 %v660, %v661
      %663 = vadd.xlane.f32.xlu0 %v662
      %v664 = vpop.xlane.xlu0 %663
      %v665 = vadd.f32 %v382, %v383
      %v666 = vadd.f32 %v665, %v384
      %v667 = vadd.f32 %v666, %v385
      %v668 = vadd.f32 %v667, %v386
      %v669 = vadd.f32 %v668, %v387
      %v670 = vsel %vm408, %v388, 0.0
      %v671 = vadd.f32 %v669, %v670
      %672 = vadd.xlane.f32.xlu0 %v671
      %v673 = vpop.xlane.xlu0 %672
      %v674 = vadd.f32 %v389, %v390
      %v675 = vadd.f32 %v674, %v391
      %v676 = vadd.f32 %v675, %v392
      %v677 = vadd.f32 %v676, %v393
      %v678 = vadd.f32 %v677, %v394
      %v679 = vsel %vm408, %v395, 0.0
      %v680 = vadd.f32 %v678, %v679
      %681 = vadd.xlane.f32.xlu0 %v680
      %v682 = vpop.xlane.xlu0 %681
      %v683 = vadd.f32 %v396, %v397
      %v684 = vadd.f32 %v683, %v398
      %v685 = vadd.f32 %v684, %v399
      %v686 = vadd.f32 %v685, %v400
      %v687 = vadd.f32 %v686, %v401
      %v688 = vsel %vm408, %v402, 0.0
      %v689 = vadd.f32 %v687, %v688
      %690 = vadd.xlane.f32.xlu0 %v689
      %v691 = vpop.xlane.xlu0 %690
      %v692 = vmul.f32 %v179, %v179
      %v693 = vmul.f32 %v180, %v180
      %v694 = vmul.f32 %v181, %v181
      %v695 = vmul.f32 %v182, %v182
      %v696 = vmul.f32 %v183, %v183
      %v697 = vmul.f32 %v184, %v184
      %v698 = vmul.f32 %v185, %v185
      %v699 = vmul.f32 %v186, %v186
      %v700 = vmul.f32 %v187, %v187
      %v701 = vmul.f32 %v188, %v188
      %v702 = vmul.f32 %v189, %v189
      %v703 = vmul.f32 %v190, %v190
      %v704 = vmul.f32 %v191, %v191
      %v705 = vmul.f32 %v192, %v192
      %v706 = vmul.f32 %v193, %v193
      %v707 = vmul.f32 %v194, %v194
      %v708 = vmul.f32 %v195, %v195
      %v709 = vmul.f32 %v196, %v196
      %v710 = vmul.f32 %v197, %v197
      %v711 = vmul.f32 %v198, %v198
      %v712 = vmul.f32 %v199, %v199
      %v713 = vmul.f32 %v200, %v200
      %v714 = vmul.f32 %v201, %v201
      %v715 = vmul.f32 %v202, %v202
      %v716 = vmul.f32 %v203, %v203
      %v717 = vmul.f32 %v204, %v204
      %v718 = vmul.f32 %v205, %v205
      %v719 = vmul.f32 %v206, %v206
      %v720 = vmul.f32 %v207, %v207
      %v721 = vmul.f32 %v208, %v208
      %v722 = vmul.f32 %v209, %v209
      %v723 = vmul.f32 %v210, %v210
      %v724 = vmul.f32 %v211, %v211
      %v725 = vmul.f32 %v212, %v212
      %v726 = vmul.f32 %v213, %v213
      %v727 = vmul.f32 %v214, %v214
      %v728 = vmul.f32 %v215, %v215
      %v729 = vmul.f32 %v216, %v216
      %v730 = vmul.f32 %v217, %v217
      %v731 = vmul.f32 %v218, %v218
      %v732 = vmul.f32 %v219, %v219
      %v733 = vmul.f32 %v220, %v220
      %v734 = vmul.f32 %v221, %v221
      %v735 = vmul.f32 %v222, %v222
      %v736 = vmul.f32 %v223, %v223
      %v737 = vmul.f32 %v224, %v224
      %v738 = vmul.f32 %v225, %v225
      %v739 = vmul.f32 %v226, %v226
      %v740 = vmul.f32 %v227, %v227
      %v741 = vmul.f32 %v228, %v228
      %v742 = vmul.f32 %v229, %v229
      %v743 = vmul.f32 %v230, %v230
      %v744 = vmul.f32 %v231, %v231
      %v745 = vmul.f32 %v232, %v232
      %v746 = vmul.f32 %v233, %v233
      %v747 = vmul.f32 %v234, %v234
      %v748 = vmul.f32 %v235, %v235
      %v749 = vmul.f32 %v236, %v236
      %v750 = vmul.f32 %v237, %v237
      %v751 = vmul.f32 %v238, %v238
      %v752 = vmul.f32 %v239, %v239
      %v753 = vmul.f32 %v240, %v240
      %v754 = vmul.f32 %v241, %v241
      %v755 = vmul.f32 %v242, %v242
      %v756 = vmul.f32 %v243, %v243
      %v757 = vmul.f32 %v244, %v244
      %v758 = vmul.f32 %v245, %v245
      %v759 = vmul.f32 %v246, %v246
      %v760 = vmul.f32 %v247, %v247
      %v761 = vmul.f32 %v248, %v248
      %v762 = vmul.f32 %v249, %v249
      %v763 = vmul.f32 %v250, %v250
      %v764 = vmul.f32 %v251, %v251
      %v765 = vmul.f32 %v252, %v252
      %v766 = vmul.f32 %v253, %v253
      %v767 = vmul.f32 %v254, %v254
      %v768 = vmul.f32 %v255, %v255
      %v769 = vmul.f32 %v256, %v256
      %v770 = vmul.f32 %v257, %v257
      %v771 = vmul.f32 %v258, %v258
      %v772 = vmul.f32 %v259, %v259
      %v773 = vmul.f32 %v260, %v260
      %v774 = vmul.f32 %v261, %v261
      %v775 = vmul.f32 %v262, %v262
      %v776 = vmul.f32 %v263, %v263
      %v777 = vmul.f32 %v264, %v264
      %v778 = vmul.f32 %v265, %v265
      %v779 = vmul.f32 %v266, %v266
      %v780 = vmul.f32 %v267, %v267
      %v781 = vmul.f32 %v268, %v268
      %v782 = vmul.f32 %v269, %v269
      %v783 = vmul.f32 %v270, %v270
      %v784 = vmul.f32 %v271, %v271
      %v785 = vmul.f32 %v272, %v272
      %v786 = vmul.f32 %v273, %v273
      %v787 = vmul.f32 %v274, %v274
      %v788 = vmul.f32 %v275, %v275
      %v789 = vmul.f32 %v276, %v276
      %v790 = vmul.f32 %v277, %v277
      %v791 = vmul.f32 %v278, %v278
      %v792 = vmul.f32 %v279, %v279
      %v793 = vmul.f32 %v280, %v280
      %v794 = vmul.f32 %v281, %v281
      %v795 = vmul.f32 %v282, %v282
      %v796 = vmul.f32 %v283, %v283
      %v797 = vmul.f32 %v284, %v284
      %v798 = vmul.f32 %v285, %v285
      %v799 = vmul.f32 %v286, %v286
      %v800 = vmul.f32 %v287, %v287
      %v801 = vmul.f32 %v288, %v288
      %v802 = vmul.f32 %v289, %v289
      %v803 = vmul.f32 %v290, %v290
      %v804 = vmul.f32 %v291, %v291
      %v805 = vmul.f32 %v292, %v292
      %v806 = vmul.f32 %v293, %v293
      %v807 = vmul.f32 %v294, %v294
      %v808 = vmul.f32 %v295, %v295
      %v809 = vmul.f32 %v296, %v296
      %v810 = vmul.f32 %v297, %v297
      %v811 = vmul.f32 %v298, %v298
      %v812 = vmul.f32 %v299, %v299
      %v813 = vmul.f32 %v300, %v300
      %v814 = vmul.f32 %v301, %v301
      %v815 = vmul.f32 %v302, %v302
      %v816 = vmul.f32 %v303, %v303
      %v817 = vmul.f32 %v304, %v304
      %v818 = vmul.f32 %v305, %v305
      %v819 = vmul.f32 %v306, %v306
      %v820 = vmul.f32 %v307, %v307
      %v821 = vmul.f32 %v308, %v308
      %v822 = vmul.f32 %v309, %v309
      %v823 = vmul.f32 %v310, %v310
      %v824 = vmul.f32 %v311, %v311
      %v825 = vmul.f32 %v312, %v312
      %v826 = vmul.f32 %v313, %v313
      %v827 = vmul.f32 %v314, %v314
      %v828 = vmul.f32 %v315, %v315
      %v829 = vmul.f32 %v316, %v316
      %v830 = vmul.f32 %v317, %v317
      %v831 = vmul.f32 %v318, %v318
      %v832 = vmul.f32 %v319, %v319
      %v833 = vmul.f32 %v320, %v320
      %v834 = vmul.f32 %v321, %v321
      %v835 = vmul.f32 %v322, %v322
      %v836 = vmul.f32 %v323, %v323
      %v837 = vmul.f32 %v324, %v324
      %v838 = vmul.f32 %v325, %v325
      %v839 = vmul.f32 %v326, %v326
      %v840 = vmul.f32 %v327, %v327
      %v841 = vmul.f32 %v328, %v328
      %v842 = vmul.f32 %v329, %v329
      %v843 = vmul.f32 %v330, %v330
      %v844 = vmul.f32 %v331, %v331
      %v845 = vmul.f32 %v332, %v332
      %v846 = vmul.f32 %v333, %v333
      %v847 = vmul.f32 %v334, %v334
      %v848 = vmul.f32 %v335, %v335
      %v849 = vmul.f32 %v336, %v336
      %v850 = vmul.f32 %v337, %v337
      %v851 = vmul.f32 %v338, %v338
      %v852 = vmul.f32 %v339, %v339
      %v853 = vmul.f32 %v340, %v340
      %v854 = vmul.f32 %v341, %v341
      %v855 = vmul.f32 %v342, %v342
      %v856 = vmul.f32 %v343, %v343
      %v857 = vmul.f32 %v344, %v344
      %v858 = vmul.f32 %v345, %v345
      %v859 = vmul.f32 %v346, %v346
      %v860 = vmul.f32 %v347, %v347
      %v861 = vmul.f32 %v348, %v348
      %v862 = vmul.f32 %v349, %v349
      %v863 = vmul.f32 %v350, %v350
      %v864 = vmul.f32 %v351, %v351
      %v865 = vmul.f32 %v352, %v352
      %v866 = vmul.f32 %v353, %v353
      %v867 = vmul.f32 %v354, %v354
      %v868 = vmul.f32 %v355, %v355
      %v869 = vmul.f32 %v356, %v356
      %v870 = vmul.f32 %v357, %v357
      %v871 = vmul.f32 %v358, %v358
      %v872 = vmul.f32 %v359, %v359
      %v873 = vmul.f32 %v360, %v360
      %v874 = vmul.f32 %v361, %v361
      %v875 = vmul.f32 %v362, %v362
      %v876 = vmul.f32 %v363, %v363
      %v877 = vmul.f32 %v364, %v364
      %v878 = vmul.f32 %v365, %v365
      %v879 = vmul.f32 %v366, %v366
      %v880 = vmul.f32 %v367, %v367
      %v881 = vmul.f32 %v368, %v368
      %v882 = vmul.f32 %v369, %v369
      %v883 = vmul.f32 %v370, %v370
      %v884 = vmul.f32 %v371, %v371
      %v885 = vmul.f32 %v372, %v372
      %v886 = vmul.f32 %v373, %v373
      %v887 = vmul.f32 %v374, %v374
      %v888 = vmul.f32 %v375, %v375
      %v889 = vmul.f32 %v376, %v376
      %v890 = vmul.f32 %v377, %v377
      %v891 = vmul.f32 %v378, %v378
      %v892 = vmul.f32 %v379, %v379
      %v893 = vmul.f32 %v380, %v380
      %v894 = vmul.f32 %v381, %v381
      %v895 = vmul.f32 %v382, %v382
      %v896 = vmul.f32 %v383, %v383
      %v897 = vmul.f32 %v384, %v384
      %v898 = vmul.f32 %v385, %v385
      %v899 = vmul.f32 %v386, %v386
      %v900 = vmul.f32 %v387, %v387
      %v901 = vmul.f32 %v388, %v388
      %v902 = vmul.f32 %v389, %v389
      %v903 = vmul.f32 %v390, %v390
      %v904 = vmul.f32 %v391, %v391
      %v905 = vmul.f32 %v392, %v392
      %v906 = vmul.f32 %v393, %v393
      %v907 = vmul.f32 %v394, %v394
      %v908 = vmul.f32 %v395, %v395
      %v909 = vmul.f32 %v396, %v396
      %v910 = vmul.f32 %v397, %v397
      %v911 = vmul.f32 %v398, %v398
      %v912 = vmul.f32 %v399, %v399
      %v913 = vmul.f32 %v400, %v400
      %v914 = vmul.f32 %v401, %v401
      %v915 = vmul.f32 %v402, %v402
      %v916 = vadd.f32 %v692, %v693
      %v917 = vadd.f32 %v916, %v694
      %v918 = vadd.f32 %v917, %v695
      %v919 = vadd.f32 %v918, %v696
      %v920 = vadd.f32 %v919, %v697
      %v921 = vsel %vm408, %v698, 0.0
      %v922 = vadd.f32 %v920, %v921
      %923 = vadd.xlane.f32.xlu0 %v922
      %v924 = vpop.xlane.xlu0 %923
      %v925 = vadd.f32 %v699, %v700
      %v926 = vadd.f32 %v925, %v701
      %v927 = vadd.f32 %v926, %v702
      %v928 = vadd.f32 %v927, %v703
      %v929 = vadd.f32 %v928, %v704
      %v930 = vsel %vm408, %v705, 0.0
      %v931 = vadd.f32 %v929, %v930
      %932 = vadd.xlane.f32.xlu0 %v931
      %v933 = vpop.xlane.xlu0 %932
      %v934 = vadd.f32 %v706, %v707
      %v935 = vadd.f32 %v934, %v708
      %v936 = vadd.f32 %v935, %v709
      %v937 = vadd.f32 %v936, %v710
      %v938 = vadd.f32 %v937, %v711
      %v939 = vsel %vm408, %v712, 0.0
      %v940 = vadd.f32 %v938, %v939
      %941 = vadd.xlane.f32.xlu0 %v940
      %v942 = vpop.xlane.xlu0 %941
      %v943 = vadd.f32 %v713, %v714
      %v944 = vadd.f32 %v943, %v715
      %v945 = vadd.f32 %v944, %v716
      %v946 = vadd.f32 %v945, %v717
      %v947 = vadd.f32 %v946, %v718
      %v948 = vsel %vm408, %v719, 0.0
      %v949 = vadd.f32 %v947, %v948
      %950 = vadd.xlane.f32.xlu0 %v949
      %v951 = vpop.xlane.xlu0 %950
      %v952 = vadd.f32 %v720, %v721
      %v953 = vadd.f32 %v952, %v722
      %v954 = vadd.f32 %v953, %v723
      %v955 = vadd.f32 %v954, %v724
      %v956 = vadd.f32 %v955, %v725
      %v957 = vsel %vm408, %v726, 0.0
      %v958 = vadd.f32 %v956, %v957
      %959 = vadd.xlane.f32.xlu0 %v958
      %v960 = vpop.xlane.xlu0 %959
      %v961 = vadd.f32 %v727, %v728
      %v962 = vadd.f32 %v961, %v729
      %v963 = vadd.f32 %v962, %v730
      %v964 = vadd.f32 %v963, %v731
      %v965 = vadd.f32 %v964, %v732
      %v966 = vsel %vm408, %v733, 0.0
      %v967 = vadd.f32 %v965, %v966
      %968 = vadd.xlane.f32.xlu0 %v967
      %v969 = vpop.xlane.xlu0 %968
      %v970 = vadd.f32 %v734, %v735
      %v971 = vadd.f32 %v970, %v736
      %v972 = vadd.f32 %v971, %v737
      %v973 = vadd.f32 %v972, %v738
      %v974 = vadd.f32 %v973, %v739
      %v975 = vsel %vm408, %v740, 0.0
      %v976 = vadd.f32 %v974, %v975
      %977 = vadd.xlane.f32.xlu0 %v976
      %v978 = vpop.xlane.xlu0 %977
      %v979 = vadd.f32 %v741, %v742
      %v980 = vadd.f32 %v979, %v743
      %v981 = vadd.f32 %v980, %v744
      %v982 = vadd.f32 %v981, %v745
      %v983 = vadd.f32 %v982, %v746
      %v984 = vsel %vm408, %v747, 0.0
      %v985 = vadd.f32 %v983, %v984
      %986 = vadd.xlane.f32.xlu0 %v985
      %v987 = vpop.xlane.xlu0 %986
      %v988 = vadd.f32 %v748, %v749
      %v989 = vadd.f32 %v988, %v750
      %v990 = vadd.f32 %v989, %v751
      %v991 = vadd.f32 %v990, %v752
      %v992 = vadd.f32 %v991, %v753
      %v993 = vsel %vm408, %v754, 0.0
      %v994 = vadd.f32 %v992, %v993
      %995 = vadd.xlane.f32.xlu0 %v994
      %v996 = vpop.xlane.xlu0 %995
      %v997 = vadd.f32 %v755, %v756
      %v998 = vadd.f32 %v997, %v757
      %v999 = vadd.f32 %v998, %v758
      %v1000 = vadd.f32 %v999, %v759
      %v1001 = vadd.f32 %v1000, %v760
      %v1002 = vsel %vm408, %v761, 0.0
      %v1003 = vadd.f32 %v1001, %v1002
      %1004 = vadd.xlane.f32.xlu0 %v1003
      %v1005 = vpop.xlane.xlu0 %1004
      %v1006 = vadd.f32 %v762, %v763
      %v1007 = vadd.f32 %v1006, %v764
      %v1008 = vadd.f32 %v1007, %v765
      %v1009 = vadd.f32 %v1008, %v766
      %v1010 = vadd.f32 %v1009, %v767
      %v1011 = vsel %vm408, %v768, 0.0
      %v1012 = vadd.f32 %v1010, %v1011
      %1013 = vadd.xlane.f32.xlu0 %v1012
      %v1014 = vpop.xlane.xlu0 %1013
      %v1015 = vadd.f32 %v769, %v770
      %v1016 = vadd.f32 %v1015, %v771
      %v1017 = vadd.f32 %v1016, %v772
      %v1018 = vadd.f32 %v1017, %v773
      %v1019 = vadd.f32 %v1018, %v774
      %v1020 = vsel %vm408, %v775, 0.0
      %v1021 = vadd.f32 %v1019, %v1020
      %1022 = vadd.xlane.f32.xlu0 %v1021
      %v1023 = vpop.xlane.xlu0 %1022
      %v1024 = vadd.f32 %v776, %v777
      %v1025 = vadd.f32 %v1024, %v778
      %v1026 = vadd.f32 %v1025, %v779
      %v1027 = vadd.f32 %v1026, %v780
      %v1028 = vadd.f32 %v1027, %v781
      %v1029 = vsel %vm408, %v782, 0.0
      %v1030 = vadd.f32 %v1028, %v1029
      %1031 = vadd.xlane.f32.xlu0 %v1030
      %v1032 = vpop.xlane.xlu0 %1031
      %v1033 = vadd.f32 %v783, %v784
      %v1034 = vadd.f32 %v1033, %v785
      %v1035 = vadd.f32 %v1034, %v786
      %v1036 = vadd.f32 %v1035, %v787
      %v1037 = vadd.f32 %v1036, %v788
      %v1038 = vsel %vm408, %v789, 0.0
      %v1039 = vadd.f32 %v1037, %v1038
      %1040 = vadd.xlane.f32.xlu0 %v1039
      %v1041 = vpop.xlane.xlu0 %1040
      %v1042 = vadd.f32 %v790, %v791
      %v1043 = vadd.f32 %v1042, %v792
      %v1044 = vadd.f32 %v1043, %v793
      %v1045 = vadd.f32 %v1044, %v794
      %v1046 = vadd.f32 %v1045, %v795
      %v1047 = vsel %vm408, %v796, 0.0
      %v1048 = vadd.f32 %v1046, %v1047
      %1049 = vadd.xlane.f32.xlu0 %v1048
      %v1050 = vpop.xlane.xlu0 %1049
      %v1051 = vadd.f32 %v797, %v798
      %v1052 = vadd.f32 %v1051, %v799
      %v1053 = vadd.f32 %v1052, %v800
      %v1054 = vadd.f32 %v1053, %v801
      %v1055 = vadd.f32 %v1054, %v802
      %v1056 = vsel %vm408, %v803, 0.0
      %v1057 = vadd.f32 %v1055, %v1056
      %1058 = vadd.xlane.f32.xlu0 %v1057
      %v1059 = vpop.xlane.xlu0 %1058
      %v1060 = vadd.f32 %v804, %v805
      %v1061 = vadd.f32 %v1060, %v806
      %v1062 = vadd.f32 %v1061, %v807
      %v1063 = vadd.f32 %v1062, %v808
      %v1064 = vadd.f32 %v1063, %v809
      %v1065 = vsel %vm408, %v810, 0.0
      %v1066 = vadd.f32 %v1064, %v1065
      %1067 = vadd.xlane.f32.xlu0 %v1066
      %v1068 = vpop.xlane.xlu0 %1067
      %v1069 = vadd.f32 %v811, %v812
      %v1070 = vadd.f32 %v1069, %v813
      %v1071 = vadd.f32 %v1070, %v814
      %v1072 = vadd.f32 %v1071, %v815
      %v1073 = vadd.f32 %v1072, %v816
      %v1074 = vsel %vm408, %v817, 0.0
      %v1075 = vadd.f32 %v1073, %v1074
      %1076 = vadd.xlane.f32.xlu0 %v1075
      %v1077 = vpop.xlane.xlu0 %1076
      %v1078 = vadd.f32 %v818, %v819
      %v1079 = vadd.f32 %v1078, %v820
      %v1080 = vadd.f32 %v1079, %v821
      %v1081 = vadd.f32 %v1080, %v822
      %v1082 = vadd.f32 %v1081, %v823
      %v1083 = vsel %vm408, %v824, 0.0
      %v1084 = vadd.f32 %v1082, %v1083
      %1085 = vadd.xlane.f32.xlu0 %v1084
      %v1086 = vpop.xlane.xlu0 %1085
      %v1087 = vadd.f32 %v825, %v826
      %v1088 = vadd.f32 %v1087, %v827
      %v1089 = vadd.f32 %v1088, %v828
      %v1090 = vadd.f32 %v1089, %v829
      %v1091 = vadd.f32 %v1090, %v830
      %v1092 = vsel %vm408, %v831, 0.0
      %v1093 = vadd.f32 %v1091, %v1092
      %1094 = vadd.xlane.f32.xlu0 %v1093
      %v1095 = vpop.xlane.xlu0 %1094
      %v1096 = vadd.f32 %v832, %v833
      %v1097 = vadd.f32 %v1096, %v834
      %v1098 = vadd.f32 %v1097, %v835
      %v1099 = vadd.f32 %v1098, %v836
      %v1100 = vadd.f32 %v1099, %v837
      %v1101 = vsel %vm408, %v838, 0.0
      %v1102 = vadd.f32 %v1100, %v1101
      %1103 = vadd.xlane.f32.xlu0 %v1102
      %v1104 = vpop.xlane.xlu0 %1103
      %v1105 = vadd.f32 %v839, %v840
      %v1106 = vadd.f32 %v1105, %v841
      %v1107 = vadd.f32 %v1106, %v842
      %v1108 = vadd.f32 %v1107, %v843
      %v1109 = vadd.f32 %v1108, %v844
      %v1110 = vsel %vm408, %v845, 0.0
      %v1111 = vadd.f32 %v1109, %v1110
      %1112 = vadd.xlane.f32.xlu0 %v1111
      %v1113 = vpop.xlane.xlu0 %1112
      %v1114 = vadd.f32 %v846, %v847
      %v1115 = vadd.f32 %v1114, %v848
      %v1116 = vadd.f32 %v1115, %v849
      %v1117 = vadd.f32 %v1116, %v850
      %v1118 = vadd.f32 %v1117, %v851
      %v1119 = vsel %vm408, %v852, 0.0
      %v1120 = vadd.f32 %v1118, %v1119
      %1121 = vadd.xlane.f32.xlu0 %v1120
      %v1122 = vpop.xlane.xlu0 %1121
      %v1123 = vadd.f32 %v853, %v854
      %v1124 = vadd.f32 %v1123, %v855
      %v1125 = vadd.f32 %v1124, %v856
      %v1126 = vadd.f32 %v1125, %v857
      %v1127 = vadd.f32 %v1126, %v858
      %v1128 = vsel %vm408, %v859, 0.0
      %v1129 = vadd.f32 %v1127, %v1128
      %1130 = vadd.xlane.f32.xlu0 %v1129
      %v1131 = vpop.xlane.xlu0 %1130
      %v1132 = vadd.f32 %v860, %v861
      %v1133 = vadd.f32 %v1132, %v862
      %v1134 = vadd.f32 %v1133, %v863
      %v1135 = vadd.f32 %v1134, %v864
      %v1136 = vadd.f32 %v1135, %v865
      %v1137 = vsel %vm408, %v866, 0.0
      %v1138 = vadd.f32 %v1136, %v1137
      %1139 = vadd.xlane.f32.xlu0 %v1138
      %v1140 = vpop.xlane.xlu0 %1139
      %v1141 = vadd.f32 %v867, %v868
      %v1142 = vadd.f32 %v1141, %v869
      %v1143 = vadd.f32 %v1142, %v870
      %v1144 = vadd.f32 %v1143, %v871
      %v1145 = vadd.f32 %v1144, %v872
      %v1146 = vsel %vm408, %v873, 0.0
      %v1147 = vadd.f32 %v1145, %v1146
      %1148 = vadd.xlane.f32.xlu0 %v1147
      %v1149 = vpop.xlane.xlu0 %1148
      %v1150 = vadd.f32 %v874, %v875
      %v1151 = vadd.f32 %v1150, %v876
      %v1152 = vadd.f32 %v1151, %v877
      %v1153 = vadd.f32 %v1152, %v878
      %v1154 = vadd.f32 %v1153, %v879
      %v1155 = vsel %vm408, %v880, 0.0
      %v1156 = vadd.f32 %v1154, %v1155
      %1157 = vadd.xlane.f32.xlu0 %v1156
      %v1158 = vpop.xlane.xlu0 %1157
      %v1159 = vadd.f32 %v881, %v882
      %v1160 = vadd.f32 %v1159, %v883
      %v1161 = vadd.f32 %v1160, %v884
      %v1162 = vadd.f32 %v1161, %v885
      %v1163 = vadd.f32 %v1162, %v886
      %v1164 = vsel %vm408, %v887, 0.0
      %v1165 = vadd.f32 %v1163, %v1164
      %1166 = vadd.xlane.f32.xlu0 %v1165
      %v1167 = vpop.xlane.xlu0 %1166
      %v1168 = vadd.f32 %v888, %v889
      %v1169 = vadd.f32 %v1168, %v890
      %v1170 = vadd.f32 %v1169, %v891
      %v1171 = vadd.f32 %v1170, %v892
      %v1172 = vadd.f32 %v1171, %v893
      %v1173 = vsel %vm408, %v894, 0.0
      %v1174 = vadd.f32 %v1172, %v1173
      %1175 = vadd.xlane.f32.xlu0 %v1174
      %v1176 = vpop.xlane.xlu0 %1175
      %v1177 = vadd.f32 %v895, %v896
      %v1178 = vadd.f32 %v1177, %v897
      %v1179 = vadd.f32 %v1178, %v898
      %v1180 = vadd.f32 %v1179, %v899
      %v1181 = vadd.f32 %v1180, %v900
      %v1182 = vsel %vm408, %v901, 0.0
      %v1183 = vadd.f32 %v1181, %v1182
      %1184 = vadd.xlane.f32.xlu0 %v1183
      %v1185 = vpop.xlane.xlu0 %1184
      %v1186 = vadd.f32 %v902, %v903
      %v1187 = vadd.f32 %v1186, %v904
      %v1188 = vadd.f32 %v1187, %v905
      %v1189 = vadd.f32 %v1188, %v906
      %v1190 = vadd.f32 %v1189, %v907
      %v1191 = vsel %vm408, %v908, 0.0
      %v1192 = vadd.f32 %v1190, %v1191
      %1193 = vadd.xlane.f32.xlu0 %v1192
      %v1194 = vpop.xlane.xlu0 %1193
      %v1195 = vadd.f32 %v909, %v910
      %v1196 = vadd.f32 %v1195, %v911
      %v1197 = vadd.f32 %v1196, %v912
      %v1198 = vadd.f32 %v1197, %v913
      %v1199 = vadd.f32 %v1198, %v914
      %v1200 = vsel %vm408, %v915, 0.0
      %v1201 = vadd.f32 %v1199, %v1200
      %1202 = vadd.xlane.f32.xlu0 %v1201
      %v1203 = vpop.xlane.xlu0 %1202
      %v1204 = vmul.f32 %v412, 0.0012755102
      %v1205 = vmul.f32 %v421, 0.0012755102
      %v1206 = vmul.f32 %v430, 0.0012755102
      %v1207 = vmul.f32 %v439, 0.0012755102
      %v1208 = vmul.f32 %v448, 0.0012755102
      %v1209 = vmul.f32 %v457, 0.0012755102
      %v1210 = vmul.f32 %v466, 0.0012755102
      %v1211 = vmul.f32 %v475, 0.0012755102
      %v1212 = vmul.f32 %v484, 0.0012755102
      %v1213 = vmul.f32 %v493, 0.0012755102
      %v1214 = vmul.f32 %v502, 0.0012755102
      %v1215 = vmul.f32 %v511, 0.0012755102
      %v1216 = vmul.f32 %v520, 0.0012755102
      %v1217 = vmul.f32 %v529, 0.0012755102
      %v1218 = vmul.f32 %v538, 0.0012755102
      %v1219 = vmul.f32 %v547, 0.0012755102
      %v1220 = vmul.f32 %v556, 0.0012755102
      %v1221 = vmul.f32 %v565, 0.0012755102
      %v1222 = vmul.f32 %v574, 0.0012755102
      %v1223 = vmul.f32 %v583, 0.0012755102
      %v1224 = vmul.f32 %v592, 0.0012755102
      %v1225 = vmul.f32 %v601, 0.0012755102
      %v1226 = vmul.f32 %v610, 0.0012755102
      %v1227 = vmul.f32 %v619, 0.0012755102
      %v1228 = vmul.f32 %v628, 0.0012755102
      %v1229 = vmul.f32 %v637, 0.0012755102
      %v1230 = vmul.f32 %v646, 0.0012755102
      %v1231 = vmul.f32 %v655, 0.0012755102
      %v1232 = vmul.f32 %v664, 0.0012755102
      %v1233 = vmul.f32 %v673, 0.0012755102
      %v1234 = vmul.f32 %v682, 0.0012755102
      %v1235 = vmul.f32 %v691, 0.0012755102
      %v1236 = vmul.f32 %v924, 0.0012755102
      %v1237 = vmul.f32 %v933, 0.0012755102
      %v1238 = vmul.f32 %v942, 0.0012755102
      %v1239 = vmul.f32 %v951, 0.0012755102
      %v1240 = vmul.f32 %v960, 0.0012755102
      %v1241 = vmul.f32 %v969, 0.0012755102
      %v1242 = vmul.f32 %v978, 0.0012755102
      %v1243 = vmul.f32 %v987, 0.0012755102
      %v1244 = vmul.f32 %v996, 0.0012755102
      %v1245 = vmul.f32 %v1005, 0.0012755102
      %v1246 = vmul.f32 %v1014, 0.0012755102
      %v1247 = vmul.f32 %v1023, 0.0012755102
      %v1248 = vmul.f32 %v1032, 0.0012755102
      %v1249 = vmul.f32 %v1041, 0.0012755102
      %v1250 = vmul.f32 %v1050, 0.0012755102
      %v1251 = vmul.f32 %v1059, 0.0012755102
      %v1252 = vmul.f32 %v1068, 0.0012755102
      %v1253 = vmul.f32 %v1077, 0.0012755102
      %v1254 = vmul.f32 %v1086, 0.0012755102
      %v1255 = vmul.f32 %v1095, 0.0012755102
      %v1256 = vmul.f32 %v1104, 0.0012755102
      %v1257 = vmul.f32 %v1113, 0.0012755102
      %v1258 = vmul.f32 %v1122, 0.0012755102
      %v1259 = vmul.f32 %v1131, 0.0012755102
      %v1260 = vmul.f32 %v1140, 0.0012755102
      %v1261 = vmul.f32 %v1149, 0.0012755102
      %v1262 = vmul.f32 %v1158, 0.0012755102
      %v1263 = vmul.f32 %v1167, 0.0012755102
      %v1264 = vmul.f32 %v1176, 0.0012755102
      %v1265 = vmul.f32 %v1185, 0.0012755102
      %v1266 = vmul.f32 %v1194, 0.0012755102
      %v1267 = vmul.f32 %v1203, 0.0012755102
      %v1268 = vmul.f32 %v1204, %v1204
      %v1269 = vmul.f32 %v1205, %v1205
      %v1270 = vmul.f32 %v1206, %v1206
      %v1271 = vmul.f32 %v1207, %v1207
      %v1272 = vmul.f32 %v1208, %v1208
      %v1273 = vmul.f32 %v1209, %v1209
      %v1274 = vmul.f32 %v1210, %v1210
      %v1275 = vmul.f32 %v1211, %v1211
      %v1276 = vmul.f32 %v1212, %v1212
      %v1277 = vmul.f32 %v1213, %v1213
      %v1278 = vmul.f32 %v1214, %v1214
      %v1279 = vmul.f32 %v1215, %v1215
      %v1280 = vmul.f32 %v1216, %v1216
      %v1281 = vmul.f32 %v1217, %v1217
      %v1282 = vmul.f32 %v1218, %v1218
      %v1283 = vmul.f32 %v1219, %v1219
      %v1284 = vmul.f32 %v1220, %v1220
      %v1285 = vmul.f32 %v1221, %v1221
      %v1286 = vmul.f32 %v1222, %v1222
      %v1287 = vmul.f32 %v1223, %v1223
      %v1288 = vmul.f32 %v1224, %v1224
      %v1289 = vmul.f32 %v1225, %v1225
      %v1290 = vmul.f32 %v1226, %v1226
      %v1291 = vmul.f32 %v1227, %v1227
      %v1292 = vmul.f32 %v1228, %v1228
      %v1293 = vmul.f32 %v1229, %v1229
      %v1294 = vmul.f32 %v1230, %v1230
      %v1295 = vmul.f32 %v1231, %v1231
      %v1296 = vmul.f32 %v1232, %v1232
      %v1297 = vmul.f32 %v1233, %v1233
      %v1298 = vmul.f32 %v1234, %v1234
      %v1299 = vmul.f32 %v1235, %v1235
      %v1300 = vsub.f32 %v1236, %v1268
      %v1301 = vsub.f32 %v1237, %v1269
      %v1302 = vsub.f32 %v1238, %v1270
      %v1303 = vsub.f32 %v1239, %v1271
      %v1304 = vsub.f32 %v1240, %v1272
      %v1305 = vsub.f32 %v1241, %v1273
      %v1306 = vsub.f32 %v1242, %v1274
      %v1307 = vsub.f32 %v1243, %v1275
      %v1308 = vsub.f32 %v1244, %v1276
      %v1309 = vsub.f32 %v1245, %v1277
      %v1310 = vsub.f32 %v1246, %v1278
      %v1311 = vsub.f32 %v1247, %v1279
      %v1312 = vsub.f32 %v1248, %v1280
      %v1313 = vsub.f32 %v1249, %v1281
      %v1314 = vsub.f32 %v1250, %v1282
      %v1315 = vsub.f32 %v1251, %v1283
      %v1316 = vsub.f32 %v1252, %v1284
      %v1317 = vsub.f32 %v1253, %v1285
      %v1318 = vsub.f32 %v1254, %v1286
      %v1319 = vsub.f32 %v1255, %v1287
      %v1320 = vsub.f32 %v1256, %v1288
      %v1321 = vsub.f32 %v1257, %v1289
      %v1322 = vsub.f32 %v1258, %v1290
      %v1323 = vsub.f32 %v1259, %v1291
      %v1324 = vsub.f32 %v1260, %v1292
      %v1325 = vsub.f32 %v1261, %v1293
      %v1326 = vsub.f32 %v1262, %v1294
      %v1327 = vsub.f32 %v1263, %v1295
      %v1328 = vsub.f32 %v1264, %v1296
      %v1329 = vsub.f32 %v1265, %v1297
      %v1330 = vsub.f32 %v1266, %v1298
      %v1331 = vsub.f32 %v1267, %v1299
      %v1332 = vmax.f32 %v1300, 0.0
      %v1333 = vmax.f32 %v1301, 0.0
      %v1334 = vmax.f32 %v1302, 0.0
      %v1335 = vmax.f32 %v1303, 0.0
      %v1336 = vmax.f32 %v1304, 0.0
      %v1337 = vmax.f32 %v1305, 0.0
      %v1338 = vmax.f32 %v1306, 0.0
      %v1339 = vmax.f32 %v1307, 0.0
      %v1340 = vmax.f32 %v1308, 0.0
      %v1341 = vmax.f32 %v1309, 0.0
      %v1342 = vmax.f32 %v1310, 0.0
      %v1343 = vmax.f32 %v1311, 0.0
      %v1344 = vmax.f32 %v1312, 0.0
      %v1345 = vmax.f32 %v1313, 0.0
      %v1346 = vmax.f32 %v1314, 0.0
      %v1347 = vmax.f32 %v1315, 0.0
      %v1348 = vmax.f32 %v1316, 0.0
      %v1349 = vmax.f32 %v1317, 0.0
      %v1350 = vmax.f32 %v1318, 0.0
      %v1351 = vmax.f32 %v1319, 0.0
      %v1352 = vmax.f32 %v1320, 0.0
      %v1353 = vmax.f32 %v1321, 0.0
      %v1354 = vmax.f32 %v1322, 0.0
      %v1355 = vmax.f32 %v1323, 0.0
      %v1356 = vmax.f32 %v1324, 0.0
      %v1357 = vmax.f32 %v1325, 0.0
      %v1358 = vmax.f32 %v1326, 0.0
      %v1359 = vmax.f32 %v1327, 0.0
      %v1360 = vmax.f32 %v1328, 0.0
      %v1361 = vmax.f32 %v1329, 0.0
      %v1362 = vmax.f32 %v1330, 0.0
      %v1363 = vmax.f32 %v1331, 0.0
      %v1364 = vadd.f32 %v1332, 1e-05
      %v1365 = vadd.f32 %v1333, 1e-05
      %v1366 = vadd.f32 %v1334, 1e-05
      %v1367 = vadd.f32 %v1335, 1e-05
      %v1368 = vadd.f32 %v1336, 1e-05
      %v1369 = vadd.f32 %v1337, 1e-05
      %v1370 = vadd.f32 %v1338, 1e-05
      %v1371 = vadd.f32 %v1339, 1e-05
      %v1372 = vadd.f32 %v1340, 1e-05
      %v1373 = vadd.f32 %v1341, 1e-05
      %v1374 = vadd.f32 %v1342, 1e-05
      %v1375 = vadd.f32 %v1343, 1e-05
      %v1376 = vadd.f32 %v1344, 1e-05
      %v1377 = vadd.f32 %v1345, 1e-05
      %v1378 = vadd.f32 %v1346, 1e-05
      %v1379 = vadd.f32 %v1347, 1e-05
      %v1380 = vadd.f32 %v1348, 1e-05
      %v1381 = vadd.f32 %v1349, 1e-05
      %v1382 = vadd.f32 %v1350, 1e-05
      %v1383 = vadd.f32 %v1351, 1e-05
      %v1384 = vadd.f32 %v1352, 1e-05
      %v1385 = vadd.f32 %v1353, 1e-05
      %v1386 = vadd.f32 %v1354, 1e-05
      %v1387 = vadd.f32 %v1355, 1e-05
      %v1388 = vadd.f32 %v1356, 1e-05
      %v1389 = vadd.f32 %v1357, 1e-05
      %v1390 = vadd.f32 %v1358, 1e-05
      %v1391 = vadd.f32 %v1359, 1e-05
      %v1392 = vadd.f32 %v1360, 1e-05
      %v1393 = vadd.f32 %v1361, 1e-05
      %v1394 = vadd.f32 %v1362, 1e-05
      %v1395 = vadd.f32 %v1363, 1e-05
      %v1396 = vrsqrt.pop %v1364
      %v1397 = vrsqrt.pop %v1365
      %v1398 = vrsqrt.pop %v1366
      %v1399 = vrsqrt.pop %v1367
      %v1400 = vrsqrt.pop %v1368
      %v1401 = vrsqrt.pop %v1369
      %v1402 = vrsqrt.pop %v1370
      %v1403 = vrsqrt.pop %v1371
      %v1404 = vrsqrt.pop %v1372
      %v1405 = vrsqrt.pop %v1373
      %v1406 = vrsqrt.pop %v1374
      %v1407 = vrsqrt.pop %v1375
      %v1408 = vrsqrt.pop %v1376
      %v1409 = vrsqrt.pop %v1377
      %v1410 = vrsqrt.pop %v1378
      %v1411 = vrsqrt.pop %v1379
      %v1412 = vrsqrt.pop %v1380
      %v1413 = vrsqrt.pop %v1381
      %v1414 = vrsqrt.pop %v1382
      %v1415 = vrsqrt.pop %v1383
      %v1416 = vrsqrt.pop %v1384
      %v1417 = vrsqrt.pop %v1385
      %v1418 = vrsqrt.pop %v1386
      %v1419 = vrsqrt.pop %v1387
      %v1420 = vrsqrt.pop %v1388
      %v1421 = vrsqrt.pop %v1389
      %v1422 = vrsqrt.pop %v1390
      %v1423 = vrsqrt.pop %v1391
      %v1424 = vrsqrt.pop %v1392
      %v1425 = vrsqrt.pop %v1393
      %v1426 = vrsqrt.pop %v1394
      %v1427 = vrsqrt.pop %v1395
      %s1428 = smul.u32 %s14, 256
      %s1429 = scalar_lea.vmem %s1, %s1428
      %v1430 = vld [vmem:[%s1429] sm:$0xff]
      %v1431 = vld [vmem:[%s1429 + $0x8] sm:$0xff]
      %v1432 = vld [vmem:[%s1429 + $0x10] sm:$0xff]
      %v1433 = vld [vmem:[%s1429 + $0x18] sm:$0xff]
      %v1434 = vld [vmem:[%s1429 + $0x20] sm:$0xff]
      %v1435 = vld [vmem:[%s1429 + $0x28] sm:$0xff]
      %v1436 = vld [vmem:[%s1429 + $0x30] sm:$0xff]
      %v1437 = vld [vmem:[%s1429 + $0x38] sm:$0xff]
      %v1438 = vld [vmem:[%s1429 + $0x40] sm:$0xff]
      %v1439 = vld [vmem:[%s1429 + $0x48] sm:$0xff]
      %v1440 = vld [vmem:[%s1429 + $0x50] sm:$0xff]
      %v1441 = vld [vmem:[%s1429 + $0x58] sm:$0xff]
      %v1442 = vld [vmem:[%s1429 + $0x60] sm:$0xff]
      %v1443 = vld [vmem:[%s1429 + $0x68] sm:$0xff]
      %v1444 = vld [vmem:[%s1429 + $0x70] sm:$0xff]
      %v1445 = vld [vmem:[%s1429 + $0x78] sm:$0xff]
      %v1446 = vld [vmem:[%s1429 + $0x80] sm:$0xff]
      %v1447 = vld [vmem:[%s1429 + $0x88] sm:$0xff]
      %v1448 = vld [vmem:[%s1429 + $0x90] sm:$0xff]
      %v1449 = vld [vmem:[%s1429 + $0x98] sm:$0xff]
      %v1450 = vld [vmem:[%s1429 + $0xa0] sm:$0xff]
      %v1451 = vld [vmem:[%s1429 + $0xa8] sm:$0xff]
      %v1452 = vld [vmem:[%s1429 + $0xb0] sm:$0xff]
      %v1453 = vld [vmem:[%s1429 + $0xb8] sm:$0xff]
      %v1454 = vld [vmem:[%s1429 + $0xc0] sm:$0xff]
      %v1455 = vld [vmem:[%s1429 + $0xc8] sm:$0xff]
      %v1456 = vld [vmem:[%s1429 + $0xd0] sm:$0xff]
      %v1457 = vld [vmem:[%s1429 + $0xd8] sm:$0xff]
      %v1458 = vld [vmem:[%s1429 + $0xe0] sm:$0xff]
      %v1459 = vld [vmem:[%s1429 + $0xe8] sm:$0xff]
      %v1460 = vld [vmem:[%s1429 + $0xf0] sm:$0xff]
      %v1461 = vld [vmem:[%s1429 + $0xf8] sm:$0xff]
      %s1462 = scalar_lea.vmem %s2, %s1428
      %v1463 = vld [vmem:[%s1462] sm:$0xff]
      %v1464 = vld [vmem:[%s1462 + $0x8] sm:$0xff]
      %v1465 = vld [vmem:[%s1462 + $0x10] sm:$0xff]
      %v1466 = vld [vmem:[%s1462 + $0x18] sm:$0xff]
      %v1467 = vld [vmem:[%s1462 + $0x20] sm:$0xff]
      %v1468 = vld [vmem:[%s1462 + $0x28] sm:$0xff]
      %v1469 = vld [vmem:[%s1462 + $0x30] sm:$0xff]
      %v1470 = vld [vmem:[%s1462 + $0x38] sm:$0xff]
      %v1471 = vld [vmem:[%s1462 + $0x40] sm:$0xff]
      %v1472 = vld [vmem:[%s1462 + $0x48] sm:$0xff]
      %v1473 = vld [vmem:[%s1462 + $0x50] sm:$0xff]
      %v1474 = vld [vmem:[%s1462 + $0x58] sm:$0xff]
      %v1475 = vld [vmem:[%s1462 + $0x60] sm:$0xff]
      %v1476 = vld [vmem:[%s1462 + $0x68] sm:$0xff]
      %v1477 = vld [vmem:[%s1462 + $0x70] sm:$0xff]
      %v1478 = vld [vmem:[%s1462 + $0x78] sm:$0xff]
      %v1479 = vld [vmem:[%s1462 + $0x80] sm:$0xff]
      %v1480 = vld [vmem:[%s1462 + $0x88] sm:$0xff]
      %v1481 = vld [vmem:[%s1462 + $0x90] sm:$0xff]
      %v1482 = vld [vmem:[%s1462 + $0x98] sm:$0xff]
      %v1483 = vld [vmem:[%s1462 + $0xa0] sm:$0xff]
      %v1484 = vld [vmem:[%s1462 + $0xa8] sm:$0xff]
      %v1485 = vld [vmem:[%s1462 + $0xb0] sm:$0xff]
      %v1486 = vld [vmem:[%s1462 + $0xb8] sm:$0xff]
      %v1487 = vld [vmem:[%s1462 + $0xc0] sm:$0xff]
      %v1488 = vld [vmem:[%s1462 + $0xc8] sm:$0xff]
      %v1489 = vld [vmem:[%s1462 + $0xd0] sm:$0xff]
      %v1490 = vld [vmem:[%s1462 + $0xd8] sm:$0xff]
      %v1491 = vld [vmem:[%s1462 + $0xe0] sm:$0xff]
      %v1492 = vld [vmem:[%s1462 + $0xe8] sm:$0xff]
      %v1493 = vld [vmem:[%s1462 + $0xf0] sm:$0xff]
      %v1494 = vld [vmem:[%s1462 + $0xf8] sm:$0xff]
      %v1495 = vmul.f32 %v1430, %v1396
      %v1496 = vmul.f32 %v1431, %v1397
      %v1497 = vmul.f32 %v1432, %v1398
      %v1498 = vmul.f32 %v1433, %v1399
      %v1499 = vmul.f32 %v1434, %v1400
      %v1500 = vmul.f32 %v1435, %v1401
      %v1501 = vmul.f32 %v1436, %v1402
      %v1502 = vmul.f32 %v1437, %v1403
      %v1503 = vmul.f32 %v1438, %v1404
      %v1504 = vmul.f32 %v1439, %v1405
      %v1505 = vmul.f32 %v1440, %v1406
      %v1506 = vmul.f32 %v1441, %v1407
      %v1507 = vmul.f32 %v1442, %v1408
      %v1508 = vmul.f32 %v1443, %v1409
      %v1509 = vmul.f32 %v1444, %v1410
      %v1510 = vmul.f32 %v1445, %v1411
      %v1511 = vmul.f32 %v1446, %v1412
      %v1512 = vmul.f32 %v1447, %v1413
      %v1513 = vmul.f32 %v1448, %v1414
      %v1514 = vmul.f32 %v1449, %v1415
      %v1515 = vmul.f32 %v1450, %v1416
      %v1516 = vmul.f32 %v1451, %v1417
      %v1517 = vmul.f32 %v1452, %v1418
      %v1518 = vmul.f32 %v1453, %v1419
      %v1519 = vmul.f32 %v1454, %v1420
      %v1520 = vmul.f32 %v1455, %v1421
      %v1521 = vmul.f32 %v1456, %v1422
      %v1522 = vmul.f32 %v1457, %v1423
      %v1523 = vmul.f32 %v1458, %v1424
      %v1524 = vmul.f32 %v1459, %v1425
      %v1525 = vmul.f32 %v1460, %v1426
      %v1526 = vmul.f32 %v1461, %v1427
      %v1527 = vmul.f32 %v1204, %v1495
      %v1528 = vmul.f32 %v1205, %v1496
      %v1529 = vmul.f32 %v1206, %v1497
      %v1530 = vmul.f32 %v1207, %v1498
      %v1531 = vmul.f32 %v1208, %v1499
      %v1532 = vmul.f32 %v1209, %v1500
      %v1533 = vmul.f32 %v1210, %v1501
      %v1534 = vmul.f32 %v1211, %v1502
      %v1535 = vmul.f32 %v1212, %v1503
      %v1536 = vmul.f32 %v1213, %v1504
      %v1537 = vmul.f32 %v1214, %v1505
      %v1538 = vmul.f32 %v1215, %v1506
      %v1539 = vmul.f32 %v1216, %v1507
      %v1540 = vmul.f32 %v1217, %v1508
      %v1541 = vmul.f32 %v1218, %v1509
      %v1542 = vmul.f32 %v1219, %v1510
      %v1543 = vmul.f32 %v1220, %v1511
      %v1544 = vmul.f32 %v1221, %v1512
      %v1545 = vmul.f32 %v1222, %v1513
      %v1546 = vmul.f32 %v1223, %v1514
      %v1547 = vmul.f32 %v1224, %v1515
      %v1548 = vmul.f32 %v1225, %v1516
      %v1549 = vmul.f32 %v1226, %v1517
      %v1550 = vmul.f32 %v1227, %v1518
      %v1551 = vmul.f32 %v1228, %v1519
      %v1552 = vmul.f32 %v1229, %v1520
      %v1553 = vmul.f32 %v1230, %v1521
      %v1554 = vmul.f32 %v1231, %v1522
      %v1555 = vmul.f32 %v1232, %v1523
      %v1556 = vmul.f32 %v1233, %v1524
      %v1557 = vmul.f32 %v1234, %v1525
      %v1558 = vmul.f32 %v1235, %v1526
      %v1559 = vsub.f32 %v1463, %v1527
      %v1560 = vsub.f32 %v1464, %v1528
      %v1561 = vsub.f32 %v1465, %v1529
      %v1562 = vsub.f32 %v1466, %v1530
      %v1563 = vsub.f32 %v1467, %v1531
      %v1564 = vsub.f32 %v1468, %v1532
      %v1565 = vsub.f32 %v1469, %v1533
      %v1566 = vsub.f32 %v1470, %v1534
      %v1567 = vsub.f32 %v1471, %v1535
      %v1568 = vsub.f32 %v1472, %v1536
      %v1569 = vsub.f32 %v1473, %v1537
      %v1570 = vsub.f32 %v1474, %v1538
      %v1571 = vsub.f32 %v1475, %v1539
      %v1572 = vsub.f32 %v1476, %v1540
      %v1573 = vsub.f32 %v1477, %v1541
      %v1574 = vsub.f32 %v1478, %v1542
      %v1575 = vsub.f32 %v1479, %v1543
      %v1576 = vsub.f32 %v1480, %v1544
      %v1577 = vsub.f32 %v1481, %v1545
      %v1578 = vsub.f32 %v1482, %v1546
      %v1579 = vsub.f32 %v1483, %v1547
      %v1580 = vsub.f32 %v1484, %v1548
      %v1581 = vsub.f32 %v1485, %v1549
      %v1582 = vsub.f32 %v1486, %v1550
      %v1583 = vsub.f32 %v1487, %v1551
      %v1584 = vsub.f32 %v1488, %v1552
      %v1585 = vsub.f32 %v1489, %v1553
      %v1586 = vsub.f32 %v1490, %v1554
      %v1587 = vsub.f32 %v1491, %v1555
      %v1588 = vsub.f32 %v1492, %v1556
      %v1589 = vsub.f32 %v1493, %v1557
      %v1590 = vsub.f32 %v1494, %v1558
      %1592 = vset.pattern.permute.xlu0 0
      %1593 = vperm.xlu0 %1592, %v1495
      %v1594 = vpop.permute.xlu0 %1593
      %1597 = vset.pattern.permute.xlu0 0
      %1598 = vperm.xlu0 %1597, %v1496
      %v1599 = vpop.permute.xlu0 %1598
      %1602 = vset.pattern.permute.xlu0 0
      %1603 = vperm.xlu0 %1602, %v1497
      %v1604 = vpop.permute.xlu0 %1603
      %1607 = vset.pattern.permute.xlu0 0
      %1608 = vperm.xlu0 %1607, %v1498
      %v1609 = vpop.permute.xlu0 %1608
      %1612 = vset.pattern.permute.xlu0 0
      %1613 = vperm.xlu0 %1612, %v1499
      %v1614 = vpop.permute.xlu0 %1613
      %1617 = vset.pattern.permute.xlu0 0
      %1618 = vperm.xlu0 %1617, %v1500
      %v1619 = vpop.permute.xlu0 %1618
      %1622 = vset.pattern.permute.xlu0 0
      %1623 = vperm.xlu0 %1622, %v1501
      %v1624 = vpop.permute.xlu0 %1623
      %1627 = vset.pattern.permute.xlu0 0
      %1628 = vperm.xlu0 %1627, %v1502
      %v1629 = vpop.permute.xlu0 %1628
      %1632 = vset.pattern.permute.xlu0 0
      %1633 = vperm.xlu0 %1632, %v1503
      %v1634 = vpop.permute.xlu0 %1633
      %1637 = vset.pattern.permute.xlu0 0
      %1638 = vperm.xlu0 %1637, %v1504
      %v1639 = vpop.permute.xlu0 %1638
      %1642 = vset.pattern.permute.xlu0 0
      %1643 = vperm.xlu0 %1642, %v1505
      %v1644 = vpop.permute.xlu0 %1643
      %1647 = vset.pattern.permute.xlu0 0
      %1648 = vperm.xlu0 %1647, %v1506
      %v1649 = vpop.permute.xlu0 %1648
      %1652 = vset.pattern.permute.xlu0 0
      %1653 = vperm.xlu0 %1652, %v1507
      %v1654 = vpop.permute.xlu0 %1653
      %1657 = vset.pattern.permute.xlu0 0
      %1658 = vperm.xlu0 %1657, %v1508
      %v1659 = vpop.permute.xlu0 %1658
      %1662 = vset.pattern.permute.xlu0 0
      %1663 = vperm.xlu0 %1662, %v1509
      %v1664 = vpop.permute.xlu0 %1663
      %1667 = vset.pattern.permute.xlu0 0
      %1668 = vperm.xlu0 %1667, %v1510
      %v1669 = vpop.permute.xlu0 %1668
      %1672 = vset.pattern.permute.xlu0 0
      %1673 = vperm.xlu0 %1672, %v1511
      %v1674 = vpop.permute.xlu0 %1673
      %1677 = vset.pattern.permute.xlu0 0
      %1678 = vperm.xlu0 %1677, %v1512
      %v1679 = vpop.permute.xlu0 %1678
      %1682 = vset.pattern.permute.xlu0 0
      %1683 = vperm.xlu0 %1682, %v1513
      %v1684 = vpop.permute.xlu0 %1683
      %1687 = vset.pattern.permute.xlu0 0
      %1688 = vperm.xlu0 %1687, %v1514
      %v1689 = vpop.permute.xlu0 %1688
      %1692 = vset.pattern.permute.xlu0 0
      %1693 = vperm.xlu0 %1692, %v1515
      %v1694 = vpop.permute.xlu0 %1693
      %1697 = vset.pattern.permute.xlu0 0
      %1698 = vperm.xlu0 %1697, %v1516
      %v1699 = vpop.permute.xlu0 %1698
      %1702 = vset.pattern.permute.xlu0 0
      %1703 = vperm.xlu0 %1702, %v1517
      %v1704 = vpop.permute.xlu0 %1703
      %1707 = vset.pattern.permute.xlu0 0
      %1708 = vperm.xlu0 %1707, %v1518
      %v1709 = vpop.permute.xlu0 %1708
      %1712 = vset.pattern.permute.xlu0 0
      %1713 = vperm.xlu0 %1712, %v1519
      %v1714 = vpop.permute.xlu0 %1713
      %1717 = vset.pattern.permute.xlu0 0
      %1718 = vperm.xlu0 %1717, %v1520
      %v1719 = vpop.permute.xlu0 %1718
      %1722 = vset.pattern.permute.xlu0 0
      %1723 = vperm.xlu0 %1722, %v1521
      %v1724 = vpop.permute.xlu0 %1723
      %1727 = vset.pattern.permute.xlu0 0
      %1728 = vperm.xlu0 %1727, %v1522
      %v1729 = vpop.permute.xlu0 %1728
      %1732 = vset.pattern.permute.xlu0 0
      %1733 = vperm.xlu0 %1732, %v1523
      %v1734 = vpop.permute.xlu0 %1733
      %1737 = vset.pattern.permute.xlu0 0
      %1738 = vperm.xlu0 %1737, %v1524
      %v1739 = vpop.permute.xlu0 %1738
      %1742 = vset.pattern.permute.xlu0 0
      %1743 = vperm.xlu0 %1742, %v1525
      %v1744 = vpop.permute.xlu0 %1743
      %1747 = vset.pattern.permute.xlu0 0
      %1748 = vperm.xlu0 %1747, %v1526
      %v1749 = vpop.permute.xlu0 %1748
      %v1751 = vmul.f32 %v179, %v1594
      %v1752 = vmul.f32 %v180, %v1594
      %v1753 = vmul.f32 %v181, %v1594
      %v1754 = vmul.f32 %v182, %v1594
      %v1755 = vmul.f32 %v183, %v1594
      %v1756 = vmul.f32 %v184, %v1594
      %v1757 = vmul.f32 %v185, %v1594
      %v1758 = vmul.f32 %v186, %v1599
      %v1759 = vmul.f32 %v187, %v1599
      %v1760 = vmul.f32 %v188, %v1599
      %v1761 = vmul.f32 %v189, %v1599
      %v1762 = vmul.f32 %v190, %v1599
      %v1763 = vmul.f32 %v191, %v1599
      %v1764 = vmul.f32 %v192, %v1599
      %v1765 = vmul.f32 %v193, %v1604
      %v1766 = vmul.f32 %v194, %v1604
      %v1767 = vmul.f32 %v195, %v1604
      %v1768 = vmul.f32 %v196, %v1604
      %v1769 = vmul.f32 %v197, %v1604
      %v1770 = vmul.f32 %v198, %v1604
      %v1771 = vmul.f32 %v199, %v1604
      %v1772 = vmul.f32 %v200, %v1609
      %v1773 = vmul.f32 %v201, %v1609
      %v1774 = vmul.f32 %v202, %v1609
      %v1775 = vmul.f32 %v203, %v1609
      %v1776 = vmul.f32 %v204, %v1609
      %v1777 = vmul.f32 %v205, %v1609
      %v1778 = vmul.f32 %v206, %v1609
      %v1779 = vmul.f32 %v207, %v1614
      %v1780 = vmul.f32 %v208, %v1614
      %v1781 = vmul.f32 %v209, %v1614
      %v1782 = vmul.f32 %v210, %v1614
      %v1783 = vmul.f32 %v211, %v1614
      %v1784 = vmul.f32 %v212, %v1614
      %v1785 = vmul.f32 %v213, %v1614
      %v1786 = vmul.f32 %v214, %v1619
      %v1787 = vmul.f32 %v215, %v1619
      %v1788 = vmul.f32 %v216, %v1619
      %v1789 = vmul.f32 %v217, %v1619
      %v1790 = vmul.f32 %v218, %v1619
      %v1791 = vmul.f32 %v219, %v1619
      %v1792 = vmul.f32 %v220, %v1619
      %v1793 = vmul.f32 %v221, %v1624
      %v1794 = vmul.f32 %v222, %v1624
      %v1795 = vmul.f32 %v223, %v1624
      %v1796 = vmul.f32 %v224, %v1624
      %v1797 = vmul.f32 %v225, %v1624
      %v1798 = vmul.f32 %v226, %v1624
      %v1799 = vmul.f32 %v227, %v1624
      %v1800 = vmul.f32 %v228, %v1629
      %v1801 = vmul.f32 %v229, %v1629
      %v1802 = vmul.f32 %v230, %v1629
      %v1803 = vmul.f32 %v231, %v1629
      %v1804 = vmul.f32 %v232, %v1629
      %v1805 = vmul.f32 %v233, %v1629
      %v1806 = vmul.f32 %v234, %v1629
      %v1807 = vmul.f32 %v235, %v1634
      %v1808 = vmul.f32 %v236, %v1634
      %v1809 = vmul.f32 %v237, %v1634
      %v1810 = vmul.f32 %v238, %v1634
      %v1811 = vmul.f32 %v239, %v1634
      %v1812 = vmul.f32 %v240, %v1634
      %v1813 = vmul.f32 %v241, %v1634
      %v1814 = vmul.f32 %v242, %v1639
      %v1815 = vmul.f32 %v243, %v1639
      %v1816 = vmul.f32 %v244, %v1639
      %v1817 = vmul.f32 %v245, %v1639
      %v1818 = vmul.f32 %v246, %v1639
      %v1819 = vmul.f32 %v247, %v1639
      %v1820 = vmul.f32 %v248, %v1639
      %v1821 = vmul.f32 %v249, %v1644
      %v1822 = vmul.f32 %v250, %v1644
      %v1823 = vmul.f32 %v251, %v1644
      %v1824 = vmul.f32 %v252, %v1644
      %v1825 = vmul.f32 %v253, %v1644
      %v1826 = vmul.f32 %v254, %v1644
      %v1827 = vmul.f32 %v255, %v1644
      %v1828 = vmul.f32 %v256, %v1649
      %v1829 = vmul.f32 %v257, %v1649
      %v1830 = vmul.f32 %v258, %v1649
      %v1831 = vmul.f32 %v259, %v1649
      %v1832 = vmul.f32 %v260, %v1649
      %v1833 = vmul.f32 %v261, %v1649
      %v1834 = vmul.f32 %v262, %v1649
      %v1835 = vmul.f32 %v263, %v1654
      %v1836 = vmul.f32 %v264, %v1654
      %v1837 = vmul.f32 %v265, %v1654
      %v1838 = vmul.f32 %v266, %v1654
      %v1839 = vmul.f32 %v267, %v1654
      %v1840 = vmul.f32 %v268, %v1654
      %v1841 = vmul.f32 %v269, %v1654
      %v1842 = vmul.f32 %v270, %v1659
      %v1843 = vmul.f32 %v271, %v1659
      %v1844 = vmul.f32 %v272, %v1659
      %v1845 = vmul.f32 %v273, %v1659
      %v1846 = vmul.f32 %v274, %v1659
      %v1847 = vmul.f32 %v275, %v1659
      %v1848 = vmul.f32 %v276, %v1659
      %v1849 = vmul.f32 %v277, %v1664
      %v1850 = vmul.f32 %v278, %v1664
      %v1851 = vmul.f32 %v279, %v1664
      %v1852 = vmul.f32 %v280, %v1664
      %v1853 = vmul.f32 %v281, %v1664
      %v1854 = vmul.f32 %v282, %v1664
      %v1855 = vmul.f32 %v283, %v1664
      %v1856 = vmul.f32 %v284, %v1669
      %v1857 = vmul.f32 %v285, %v1669
      %v1858 = vmul.f32 %v286, %v1669
      %v1859 = vmul.f32 %v287, %v1669
      %v1860 = vmul.f32 %v288, %v1669
      %v1861 = vmul.f32 %v289, %v1669
      %v1862 = vmul.f32 %v290, %v1669
      %v1863 = vmul.f32 %v291, %v1674
      %v1864 = vmul.f32 %v292, %v1674
      %v1865 = vmul.f32 %v293, %v1674
      %v1866 = vmul.f32 %v294, %v1674
      %v1867 = vmul.f32 %v295, %v1674
      %v1868 = vmul.f32 %v296, %v1674
      %v1869 = vmul.f32 %v297, %v1674
      %v1870 = vmul.f32 %v298, %v1679
      %v1871 = vmul.f32 %v299, %v1679
      %v1872 = vmul.f32 %v300, %v1679
      %v1873 = vmul.f32 %v301, %v1679
      %v1874 = vmul.f32 %v302, %v1679
      %v1875 = vmul.f32 %v303, %v1679
      %v1876 = vmul.f32 %v304, %v1679
      %v1877 = vmul.f32 %v305, %v1684
      %v1878 = vmul.f32 %v306, %v1684
      %v1879 = vmul.f32 %v307, %v1684
      %v1880 = vmul.f32 %v308, %v1684
      %v1881 = vmul.f32 %v309, %v1684
      %v1882 = vmul.f32 %v310, %v1684
      %v1883 = vmul.f32 %v311, %v1684
      %v1884 = vmul.f32 %v312, %v1689
      %v1885 = vmul.f32 %v313, %v1689
      %v1886 = vmul.f32 %v314, %v1689
      %v1887 = vmul.f32 %v315, %v1689
      %v1888 = vmul.f32 %v316, %v1689
      %v1889 = vmul.f32 %v317, %v1689
      %v1890 = vmul.f32 %v318, %v1689
      %v1891 = vmul.f32 %v319, %v1694
      %v1892 = vmul.f32 %v320, %v1694
      %v1893 = vmul.f32 %v321, %v1694
      %v1894 = vmul.f32 %v322, %v1694
      %v1895 = vmul.f32 %v323, %v1694
      %v1896 = vmul.f32 %v324, %v1694
      %v1897 = vmul.f32 %v325, %v1694
      %v1898 = vmul.f32 %v326, %v1699
      %v1899 = vmul.f32 %v327, %v1699
      %v1900 = vmul.f32 %v328, %v1699
      %v1901 = vmul.f32 %v329, %v1699
      %v1902 = vmul.f32 %v330, %v1699
      %v1903 = vmul.f32 %v331, %v1699
      %v1904 = vmul.f32 %v332, %v1699
      %v1905 = vmul.f32 %v333, %v1704
      %v1906 = vmul.f32 %v334, %v1704
      %v1907 = vmul.f32 %v335, %v1704
      %v1908 = vmul.f32 %v336, %v1704
      %v1909 = vmul.f32 %v337, %v1704
      %v1910 = vmul.f32 %v338, %v1704
      %v1911 = vmul.f32 %v339, %v1704
      %v1912 = vmul.f32 %v340, %v1709
      %v1913 = vmul.f32 %v341, %v1709
      %v1914 = vmul.f32 %v342, %v1709
      %v1915 = vmul.f32 %v343, %v1709
      %v1916 = vmul.f32 %v344, %v1709
      %v1917 = vmul.f32 %v345, %v1709
      %v1918 = vmul.f32 %v346, %v1709
      %v1919 = vmul.f32 %v347, %v1714
      %v1920 = vmul.f32 %v348, %v1714
      %v1921 = vmul.f32 %v349, %v1714
      %v1922 = vmul.f32 %v350, %v1714
      %v1923 = vmul.f32 %v351, %v1714
      %v1924 = vmul.f32 %v352, %v1714
      %v1925 = vmul.f32 %v353, %v1714
      %v1926 = vmul.f32 %v354, %v1719
      %v1927 = vmul.f32 %v355, %v1719
      %v1928 = vmul.f32 %v356, %v1719
      %v1929 = vmul.f32 %v357, %v1719
      %v1930 = vmul.f32 %v358, %v1719
      %v1931 = vmul.f32 %v359, %v1719
      %v1932 = vmul.f32 %v360, %v1719
      %v1933 = vmul.f32 %v361, %v1724
      %v1934 = vmul.f32 %v362, %v1724
      %v1935 = vmul.f32 %v363, %v1724
      %v1936 = vmul.f32 %v364, %v1724
      %v1937 = vmul.f32 %v365, %v1724
      %v1938 = vmul.f32 %v366, %v1724
      %v1939 = vmul.f32 %v367, %v1724
      %v1940 = vmul.f32 %v368, %v1729
      %v1941 = vmul.f32 %v369, %v1729
      %v1942 = vmul.f32 %v370, %v1729
      %v1943 = vmul.f32 %v371, %v1729
      %v1944 = vmul.f32 %v372, %v1729
      %v1945 = vmul.f32 %v373, %v1729
      %v1946 = vmul.f32 %v374, %v1729
      %v1947 = vmul.f32 %v375, %v1734
      %v1948 = vmul.f32 %v376, %v1734
      %v1949 = vmul.f32 %v377, %v1734
      %v1950 = vmul.f32 %v378, %v1734
      %v1951 = vmul.f32 %v379, %v1734
      %v1952 = vmul.f32 %v380, %v1734
      %v1953 = vmul.f32 %v381, %v1734
      %v1954 = vmul.f32 %v382, %v1739
      %v1955 = vmul.f32 %v383, %v1739
      %v1956 = vmul.f32 %v384, %v1739
      %v1957 = vmul.f32 %v385, %v1739
      %v1958 = vmul.f32 %v386, %v1739
      %v1959 = vmul.f32 %v387, %v1739
      %v1960 = vmul.f32 %v388, %v1739
      %v1961 = vmul.f32 %v389, %v1744
      %v1962 = vmul.f32 %v390, %v1744
      %v1963 = vmul.f32 %v391, %v1744
      %v1964 = vmul.f32 %v392, %v1744
      %v1965 = vmul.f32 %v393, %v1744
      %v1966 = vmul.f32 %v394, %v1744
      %v1967 = vmul.f32 %v395, %v1744
      %v1968 = vmul.f32 %v396, %v1749
      %v1969 = vmul.f32 %v397, %v1749
      %v1970 = vmul.f32 %v398, %v1749
      %v1971 = vmul.f32 %v399, %v1749
      %v1972 = vmul.f32 %v400, %v1749
      %v1973 = vmul.f32 %v401, %v1749
      %v1974 = vmul.f32 %v402, %v1749
      %1976 = vset.pattern.permute.xlu0 0
      %1977 = vperm.xlu0 %1976, %v1559
      %v1978 = vpop.permute.xlu0 %1977
      %1981 = vset.pattern.permute.xlu0 0
      %1982 = vperm.xlu0 %1981, %v1560
      %v1983 = vpop.permute.xlu0 %1982
      %1986 = vset.pattern.permute.xlu0 0
      %1987 = vperm.xlu0 %1986, %v1561
      %v1988 = vpop.permute.xlu0 %1987
      %1991 = vset.pattern.permute.xlu0 0
      %1992 = vperm.xlu0 %1991, %v1562
      %v1993 = vpop.permute.xlu0 %1992
      %1996 = vset.pattern.permute.xlu0 0
      %1997 = vperm.xlu0 %1996, %v1563
      %v1998 = vpop.permute.xlu0 %1997
      %2001 = vset.pattern.permute.xlu0 0
      %2002 = vperm.xlu0 %2001, %v1564
      %v2003 = vpop.permute.xlu0 %2002
      %2006 = vset.pattern.permute.xlu0 0
      %2007 = vperm.xlu0 %2006, %v1565
      %v2008 = vpop.permute.xlu0 %2007
      %2011 = vset.pattern.permute.xlu0 0
      %2012 = vperm.xlu0 %2011, %v1566
      %v2013 = vpop.permute.xlu0 %2012
      %2016 = vset.pattern.permute.xlu0 0
      %2017 = vperm.xlu0 %2016, %v1567
      %v2018 = vpop.permute.xlu0 %2017
      %2021 = vset.pattern.permute.xlu0 0
      %2022 = vperm.xlu0 %2021, %v1568
      %v2023 = vpop.permute.xlu0 %2022
      %2026 = vset.pattern.permute.xlu0 0
      %2027 = vperm.xlu0 %2026, %v1569
      %v2028 = vpop.permute.xlu0 %2027
      %2031 = vset.pattern.permute.xlu0 0
      %2032 = vperm.xlu0 %2031, %v1570
      %v2033 = vpop.permute.xlu0 %2032
      %2036 = vset.pattern.permute.xlu0 0
      %2037 = vperm.xlu0 %2036, %v1571
      %v2038 = vpop.permute.xlu0 %2037
      %2041 = vset.pattern.permute.xlu0 0
      %2042 = vperm.xlu0 %2041, %v1572
      %v2043 = vpop.permute.xlu0 %2042
      %2046 = vset.pattern.permute.xlu0 0
      %2047 = vperm.xlu0 %2046, %v1573
      %v2048 = vpop.permute.xlu0 %2047
      %2051 = vset.pattern.permute.xlu0 0
      %2052 = vperm.xlu0 %2051, %v1574
      %v2053 = vpop.permute.xlu0 %2052
      %2056 = vset.pattern.permute.xlu0 0
      %2057 = vperm.xlu0 %2056, %v1575
      %v2058 = vpop.permute.xlu0 %2057
      %2061 = vset.pattern.permute.xlu0 0
      %2062 = vperm.xlu0 %2061, %v1576
      %v2063 = vpop.permute.xlu0 %2062
      %2066 = vset.pattern.permute.xlu0 0
      %2067 = vperm.xlu0 %2066, %v1577
      %v2068 = vpop.permute.xlu0 %2067
      %2071 = vset.pattern.permute.xlu0 0
      %2072 = vperm.xlu0 %2071, %v1578
      %v2073 = vpop.permute.xlu0 %2072
      %2076 = vset.pattern.permute.xlu0 0
      %2077 = vperm.xlu0 %2076, %v1579
      %v2078 = vpop.permute.xlu0 %2077
      %2081 = vset.pattern.permute.xlu0 0
      %2082 = vperm.xlu0 %2081, %v1580
      %v2083 = vpop.permute.xlu0 %2082
      %2086 = vset.pattern.permute.xlu0 0
      %2087 = vperm.xlu0 %2086, %v1581
      %v2088 = vpop.permute.xlu0 %2087
      %2091 = vset.pattern.permute.xlu0 0
      %2092 = vperm.xlu0 %2091, %v1582
      %v2093 = vpop.permute.xlu0 %2092
      %2096 = vset.pattern.permute.xlu0 0
      %2097 = vperm.xlu0 %2096, %v1583
      %v2098 = vpop.permute.xlu0 %2097
      %2101 = vset.pattern.permute.xlu0 0
      %2102 = vperm.xlu0 %2101, %v1584
      %v2103 = vpop.permute.xlu0 %2102
      %2106 = vset.pattern.permute.xlu0 0
      %2107 = vperm.xlu0 %2106, %v1585
      %v2108 = vpop.permute.xlu0 %2107
      %2111 = vset.pattern.permute.xlu0 0
      %2112 = vperm.xlu0 %2111, %v1586
      %v2113 = vpop.permute.xlu0 %2112
      %2116 = vset.pattern.permute.xlu0 0
      %2117 = vperm.xlu0 %2116, %v1587
      %v2118 = vpop.permute.xlu0 %2117
      %2121 = vset.pattern.permute.xlu0 0
      %2122 = vperm.xlu0 %2121, %v1588
      %v2123 = vpop.permute.xlu0 %2122
      %2126 = vset.pattern.permute.xlu0 0
      %2127 = vperm.xlu0 %2126, %v1589
      %v2128 = vpop.permute.xlu0 %2127
      %2131 = vset.pattern.permute.xlu0 0
      %2132 = vperm.xlu0 %2131, %v1590
      %v2133 = vpop.permute.xlu0 %2132
      %v2135 = vadd.f32 %v1751, %v1978
      %v2136 = vadd.f32 %v1752, %v1978
      %v2137 = vadd.f32 %v1753, %v1978
      %v2138 = vadd.f32 %v1754, %v1978
      %v2139 = vadd.f32 %v1755, %v1978
      %v2140 = vadd.f32 %v1756, %v1978
      %v2141 = vadd.f32 %v1757, %v1978
      %v2142 = vadd.f32 %v1758, %v1983
      %v2143 = vadd.f32 %v1759, %v1983
      %v2144 = vadd.f32 %v1760, %v1983
      %v2145 = vadd.f32 %v1761, %v1983
      %v2146 = vadd.f32 %v1762, %v1983
      %v2147 = vadd.f32 %v1763, %v1983
      %v2148 = vadd.f32 %v1764, %v1983
      %v2149 = vadd.f32 %v1765, %v1988
      %v2150 = vadd.f32 %v1766, %v1988
      %v2151 = vadd.f32 %v1767, %v1988
      %v2152 = vadd.f32 %v1768, %v1988
      %v2153 = vadd.f32 %v1769, %v1988
      %v2154 = vadd.f32 %v1770, %v1988
      %v2155 = vadd.f32 %v1771, %v1988
      %v2156 = vadd.f32 %v1772, %v1993
      %v2157 = vadd.f32 %v1773, %v1993
      %v2158 = vadd.f32 %v1774, %v1993
      %v2159 = vadd.f32 %v1775, %v1993
      %v2160 = vadd.f32 %v1776, %v1993
      %v2161 = vadd.f32 %v1777, %v1993
      %v2162 = vadd.f32 %v1778, %v1993
      %v2163 = vadd.f32 %v1779, %v1998
      %v2164 = vadd.f32 %v1780, %v1998
      %v2165 = vadd.f32 %v1781, %v1998
      %v2166 = vadd.f32 %v1782, %v1998
      %v2167 = vadd.f32 %v1783, %v1998
      %v2168 = vadd.f32 %v1784, %v1998
      %v2169 = vadd.f32 %v1785, %v1998
      %v2170 = vadd.f32 %v1786, %v2003
      %v2171 = vadd.f32 %v1787, %v2003
      %v2172 = vadd.f32 %v1788, %v2003
      %v2173 = vadd.f32 %v1789, %v2003
      %v2174 = vadd.f32 %v1790, %v2003
      %v2175 = vadd.f32 %v1791, %v2003
      %v2176 = vadd.f32 %v1792, %v2003
      %v2177 = vadd.f32 %v1793, %v2008
      %v2178 = vadd.f32 %v1794, %v2008
      %v2179 = vadd.f32 %v1795, %v2008
      %v2180 = vadd.f32 %v1796, %v2008
      %v2181 = vadd.f32 %v1797, %v2008
      %v2182 = vadd.f32 %v1798, %v2008
      %v2183 = vadd.f32 %v1799, %v2008
      %v2184 = vadd.f32 %v1800, %v2013
      %v2185 = vadd.f32 %v1801, %v2013
      %v2186 = vadd.f32 %v1802, %v2013
      %v2187 = vadd.f32 %v1803, %v2013
      %v2188 = vadd.f32 %v1804, %v2013
      %v2189 = vadd.f32 %v1805, %v2013
      %v2190 = vadd.f32 %v1806, %v2013
      %v2191 = vadd.f32 %v1807, %v2018
      %v2192 = vadd.f32 %v1808, %v2018
      %v2193 = vadd.f32 %v1809, %v2018
      %v2194 = vadd.f32 %v1810, %v2018
      %v2195 = vadd.f32 %v1811, %v2018
      %v2196 = vadd.f32 %v1812, %v2018
      %v2197 = vadd.f32 %v1813, %v2018
      %v2198 = vadd.f32 %v1814, %v2023
      %v2199 = vadd.f32 %v1815, %v2023
      %v2200 = vadd.f32 %v1816, %v2023
      %v2201 = vadd.f32 %v1817, %v2023
      %v2202 = vadd.f32 %v1818, %v2023
      %v2203 = vadd.f32 %v1819, %v2023
      %v2204 = vadd.f32 %v1820, %v2023
      %v2205 = vadd.f32 %v1821, %v2028
      %v2206 = vadd.f32 %v1822, %v2028
      %v2207 = vadd.f32 %v1823, %v2028
      %v2208 = vadd.f32 %v1824, %v2028
      %v2209 = vadd.f32 %v1825, %v2028
      %v2210 = vadd.f32 %v1826, %v2028
      %v2211 = vadd.f32 %v1827, %v2028
      %v2212 = vadd.f32 %v1828, %v2033
      %v2213 = vadd.f32 %v1829, %v2033
      %v2214 = vadd.f32 %v1830, %v2033
      %v2215 = vadd.f32 %v1831, %v2033
      %v2216 = vadd.f32 %v1832, %v2033
      %v2217 = vadd.f32 %v1833, %v2033
      %v2218 = vadd.f32 %v1834, %v2033
      %v2219 = vadd.f32 %v1835, %v2038
      %v2220 = vadd.f32 %v1836, %v2038
      %v2221 = vadd.f32 %v1837, %v2038
      %v2222 = vadd.f32 %v1838, %v2038
      %v2223 = vadd.f32 %v1839, %v2038
      %v2224 = vadd.f32 %v1840, %v2038
      %v2225 = vadd.f32 %v1841, %v2038
      %v2226 = vadd.f32 %v1842, %v2043
      %v2227 = vadd.f32 %v1843, %v2043
      %v2228 = vadd.f32 %v1844, %v2043
      %v2229 = vadd.f32 %v1845, %v2043
      %v2230 = vadd.f32 %v1846, %v2043
      %v2231 = vadd.f32 %v1847, %v2043
      %v2232 = vadd.f32 %v1848, %v2043
      %v2233 = vadd.f32 %v1849, %v2048
      %v2234 = vadd.f32 %v1850, %v2048
      %v2235 = vadd.f32 %v1851, %v2048
      %v2236 = vadd.f32 %v1852, %v2048
      %v2237 = vadd.f32 %v1853, %v2048
      %v2238 = vadd.f32 %v1854, %v2048
      %v2239 = vadd.f32 %v1855, %v2048
      %v2240 = vadd.f32 %v1856, %v2053
      %v2241 = vadd.f32 %v1857, %v2053
      %v2242 = vadd.f32 %v1858, %v2053
      %v2243 = vadd.f32 %v1859, %v2053
      %v2244 = vadd.f32 %v1860, %v2053
      %v2245 = vadd.f32 %v1861, %v2053
      %v2246 = vadd.f32 %v1862, %v2053
      %v2247 = vadd.f32 %v1863, %v2058
      %v2248 = vadd.f32 %v1864, %v2058
      %v2249 = vadd.f32 %v1865, %v2058
      %v2250 = vadd.f32 %v1866, %v2058
      %v2251 = vadd.f32 %v1867, %v2058
      %v2252 = vadd.f32 %v1868, %v2058
      %v2253 = vadd.f32 %v1869, %v2058
      %v2254 = vadd.f32 %v1870, %v2063
      %v2255 = vadd.f32 %v1871, %v2063
      %v2256 = vadd.f32 %v1872, %v2063
      %v2257 = vadd.f32 %v1873, %v2063
      %v2258 = vadd.f32 %v1874, %v2063
      %v2259 = vadd.f32 %v1875, %v2063
      %v2260 = vadd.f32 %v1876, %v2063
      %v2261 = vadd.f32 %v1877, %v2068
      %v2262 = vadd.f32 %v1878, %v2068
      %v2263 = vadd.f32 %v1879, %v2068
      %v2264 = vadd.f32 %v1880, %v2068
      %v2265 = vadd.f32 %v1881, %v2068
      %v2266 = vadd.f32 %v1882, %v2068
      %v2267 = vadd.f32 %v1883, %v2068
      %v2268 = vadd.f32 %v1884, %v2073
      %v2269 = vadd.f32 %v1885, %v2073
      %v2270 = vadd.f32 %v1886, %v2073
      %v2271 = vadd.f32 %v1887, %v2073
      %v2272 = vadd.f32 %v1888, %v2073
      %v2273 = vadd.f32 %v1889, %v2073
      %v2274 = vadd.f32 %v1890, %v2073
      %v2275 = vadd.f32 %v1891, %v2078
      %v2276 = vadd.f32 %v1892, %v2078
      %v2277 = vadd.f32 %v1893, %v2078
      %v2278 = vadd.f32 %v1894, %v2078
      %v2279 = vadd.f32 %v1895, %v2078
      %v2280 = vadd.f32 %v1896, %v2078
      %v2281 = vadd.f32 %v1897, %v2078
      %v2282 = vadd.f32 %v1898, %v2083
      %v2283 = vadd.f32 %v1899, %v2083
      %v2284 = vadd.f32 %v1900, %v2083
      %v2285 = vadd.f32 %v1901, %v2083
      %v2286 = vadd.f32 %v1902, %v2083
      %v2287 = vadd.f32 %v1903, %v2083
      %v2288 = vadd.f32 %v1904, %v2083
      %v2289 = vadd.f32 %v1905, %v2088
      %v2290 = vadd.f32 %v1906, %v2088
      %v2291 = vadd.f32 %v1907, %v2088
      %v2292 = vadd.f32 %v1908, %v2088
      %v2293 = vadd.f32 %v1909, %v2088
      %v2294 = vadd.f32 %v1910, %v2088
      %v2295 = vadd.f32 %v1911, %v2088
      %v2296 = vadd.f32 %v1912, %v2093
      %v2297 = vadd.f32 %v1913, %v2093
      %v2298 = vadd.f32 %v1914, %v2093
      %v2299 = vadd.f32 %v1915, %v2093
      %v2300 = vadd.f32 %v1916, %v2093
      %v2301 = vadd.f32 %v1917, %v2093
      %v2302 = vadd.f32 %v1918, %v2093
      %v2303 = vadd.f32 %v1919, %v2098
      %v2304 = vadd.f32 %v1920, %v2098
      %v2305 = vadd.f32 %v1921, %v2098
      %v2306 = vadd.f32 %v1922, %v2098
      %v2307 = vadd.f32 %v1923, %v2098
      %v2308 = vadd.f32 %v1924, %v2098
      %v2309 = vadd.f32 %v1925, %v2098
      %v2310 = vadd.f32 %v1926, %v2103
      %v2311 = vadd.f32 %v1927, %v2103
      %v2312 = vadd.f32 %v1928, %v2103
      %v2313 = vadd.f32 %v1929, %v2103
      %v2314 = vadd.f32 %v1930, %v2103
      %v2315 = vadd.f32 %v1931, %v2103
      %v2316 = vadd.f32 %v1932, %v2103
      %v2317 = vadd.f32 %v1933, %v2108
      %v2318 = vadd.f32 %v1934, %v2108
      %v2319 = vadd.f32 %v1935, %v2108
      %v2320 = vadd.f32 %v1936, %v2108
      %v2321 = vadd.f32 %v1937, %v2108
      %v2322 = vadd.f32 %v1938, %v2108
      %v2323 = vadd.f32 %v1939, %v2108
      %v2324 = vadd.f32 %v1940, %v2113
      %v2325 = vadd.f32 %v1941, %v2113
      %v2326 = vadd.f32 %v1942, %v2113
      %v2327 = vadd.f32 %v1943, %v2113
      %v2328 = vadd.f32 %v1944, %v2113
      %v2329 = vadd.f32 %v1945, %v2113
      %v2330 = vadd.f32 %v1946, %v2113
      %v2331 = vadd.f32 %v1947, %v2118
      %v2332 = vadd.f32 %v1948, %v2118
      %v2333 = vadd.f32 %v1949, %v2118
      %v2334 = vadd.f32 %v1950, %v2118
      %v2335 = vadd.f32 %v1951, %v2118
      %v2336 = vadd.f32 %v1952, %v2118
      %v2337 = vadd.f32 %v1953, %v2118
      %v2338 = vadd.f32 %v1954, %v2123
      %v2339 = vadd.f32 %v1955, %v2123
      %v2340 = vadd.f32 %v1956, %v2123
      %v2341 = vadd.f32 %v1957, %v2123
      %v2342 = vadd.f32 %v1958, %v2123
      %v2343 = vadd.f32 %v1959, %v2123
      %v2344 = vadd.f32 %v1960, %v2123
      %v2345 = vadd.f32 %v1961, %v2128
      %v2346 = vadd.f32 %v1962, %v2128
      %v2347 = vadd.f32 %v1963, %v2128
      %v2348 = vadd.f32 %v1964, %v2128
      %v2349 = vadd.f32 %v1965, %v2128
      %v2350 = vadd.f32 %v1966, %v2128
      %v2351 = vadd.f32 %v1967, %v2128
      %v2352 = vadd.f32 %v1968, %v2133
      %v2353 = vadd.f32 %v1969, %v2133
      %v2354 = vadd.f32 %v1970, %v2133
      %v2355 = vadd.f32 %v1971, %v2133
      %v2356 = vadd.f32 %v1972, %v2133
      %v2357 = vadd.f32 %v1973, %v2133
      %v2358 = vadd.f32 %v1974, %v2133
      %v2359 = vmax.f32 %v2135, 0.0
      %v2360 = vmax.f32 %v2136, 0.0
      %v2361 = vmax.f32 %v2137, 0.0
      %v2362 = vmax.f32 %v2138, 0.0
      %v2363 = vmax.f32 %v2139, 0.0
      %v2364 = vmax.f32 %v2140, 0.0
      %v2365 = vmax.f32 %v2141, 0.0
      %v2366 = vmax.f32 %v2142, 0.0
      %v2367 = vmax.f32 %v2143, 0.0
      %v2368 = vmax.f32 %v2144, 0.0
      %v2369 = vmax.f32 %v2145, 0.0
      %v2370 = vmax.f32 %v2146, 0.0
      %v2371 = vmax.f32 %v2147, 0.0
      %v2372 = vmax.f32 %v2148, 0.0
      %v2373 = vmax.f32 %v2149, 0.0
      %v2374 = vmax.f32 %v2150, 0.0
      %v2375 = vmax.f32 %v2151, 0.0
      %v2376 = vmax.f32 %v2152, 0.0
      %v2377 = vmax.f32 %v2153, 0.0
      %v2378 = vmax.f32 %v2154, 0.0
      %v2379 = vmax.f32 %v2155, 0.0
      %v2380 = vmax.f32 %v2156, 0.0
      %v2381 = vmax.f32 %v2157, 0.0
      %v2382 = vmax.f32 %v2158, 0.0
      %v2383 = vmax.f32 %v2159, 0.0
      %v2384 = vmax.f32 %v2160, 0.0
      %v2385 = vmax.f32 %v2161, 0.0
      %v2386 = vmax.f32 %v2162, 0.0
      %v2387 = vmax.f32 %v2163, 0.0
      %v2388 = vmax.f32 %v2164, 0.0
      %v2389 = vmax.f32 %v2165, 0.0
      %v2390 = vmax.f32 %v2166, 0.0
      %v2391 = vmax.f32 %v2167, 0.0
      %v2392 = vmax.f32 %v2168, 0.0
      %v2393 = vmax.f32 %v2169, 0.0
      %v2394 = vmax.f32 %v2170, 0.0
      %v2395 = vmax.f32 %v2171, 0.0
      %v2396 = vmax.f32 %v2172, 0.0
      %v2397 = vmax.f32 %v2173, 0.0
      %v2398 = vmax.f32 %v2174, 0.0
      %v2399 = vmax.f32 %v2175, 0.0
      %v2400 = vmax.f32 %v2176, 0.0
      %v2401 = vmax.f32 %v2177, 0.0
      %v2402 = vmax.f32 %v2178, 0.0
      %v2403 = vmax.f32 %v2179, 0.0
      %v2404 = vmax.f32 %v2180, 0.0
      %v2405 = vmax.f32 %v2181, 0.0
      %v2406 = vmax.f32 %v2182, 0.0
      %v2407 = vmax.f32 %v2183, 0.0
      %v2408 = vmax.f32 %v2184, 0.0
      %v2409 = vmax.f32 %v2185, 0.0
      %v2410 = vmax.f32 %v2186, 0.0
      %v2411 = vmax.f32 %v2187, 0.0
      %v2412 = vmax.f32 %v2188, 0.0
      %v2413 = vmax.f32 %v2189, 0.0
      %v2414 = vmax.f32 %v2190, 0.0
      %v2415 = vmax.f32 %v2191, 0.0
      %v2416 = vmax.f32 %v2192, 0.0
      %v2417 = vmax.f32 %v2193, 0.0
      %v2418 = vmax.f32 %v2194, 0.0
      %v2419 = vmax.f32 %v2195, 0.0
      %v2420 = vmax.f32 %v2196, 0.0
      %v2421 = vmax.f32 %v2197, 0.0
      %v2422 = vmax.f32 %v2198, 0.0
      %v2423 = vmax.f32 %v2199, 0.0
      %v2424 = vmax.f32 %v2200, 0.0
      %v2425 = vmax.f32 %v2201, 0.0
      %v2426 = vmax.f32 %v2202, 0.0
      %v2427 = vmax.f32 %v2203, 0.0
      %v2428 = vmax.f32 %v2204, 0.0
      %v2429 = vmax.f32 %v2205, 0.0
      %v2430 = vmax.f32 %v2206, 0.0
      %v2431 = vmax.f32 %v2207, 0.0
      %v2432 = vmax.f32 %v2208, 0.0
      %v2433 = vmax.f32 %v2209, 0.0
      %v2434 = vmax.f32 %v2210, 0.0
      %v2435 = vmax.f32 %v2211, 0.0
      %v2436 = vmax.f32 %v2212, 0.0
      %v2437 = vmax.f32 %v2213, 0.0
      %v2438 = vmax.f32 %v2214, 0.0
      %v2439 = vmax.f32 %v2215, 0.0
      %v2440 = vmax.f32 %v2216, 0.0
      %v2441 = vmax.f32 %v2217, 0.0
      %v2442 = vmax.f32 %v2218, 0.0
      %v2443 = vmax.f32 %v2219, 0.0
      %v2444 = vmax.f32 %v2220, 0.0
      %v2445 = vmax.f32 %v2221, 0.0
      %v2446 = vmax.f32 %v2222, 0.0
      %v2447 = vmax.f32 %v2223, 0.0
      %v2448 = vmax.f32 %v2224, 0.0
      %v2449 = vmax.f32 %v2225, 0.0
      %v2450 = vmax.f32 %v2226, 0.0
      %v2451 = vmax.f32 %v2227, 0.0
      %v2452 = vmax.f32 %v2228, 0.0
      %v2453 = vmax.f32 %v2229, 0.0
      %v2454 = vmax.f32 %v2230, 0.0
      %v2455 = vmax.f32 %v2231, 0.0
      %v2456 = vmax.f32 %v2232, 0.0
      %v2457 = vmax.f32 %v2233, 0.0
      %v2458 = vmax.f32 %v2234, 0.0
      %v2459 = vmax.f32 %v2235, 0.0
      %v2460 = vmax.f32 %v2236, 0.0
      %v2461 = vmax.f32 %v2237, 0.0
      %v2462 = vmax.f32 %v2238, 0.0
      %v2463 = vmax.f32 %v2239, 0.0
      %v2464 = vmax.f32 %v2240, 0.0
      %v2465 = vmax.f32 %v2241, 0.0
      %v2466 = vmax.f32 %v2242, 0.0
      %v2467 = vmax.f32 %v2243, 0.0
      %v2468 = vmax.f32 %v2244, 0.0
      %v2469 = vmax.f32 %v2245, 0.0
      %v2470 = vmax.f32 %v2246, 0.0
      %v2471 = vmax.f32 %v2247, 0.0
      %v2472 = vmax.f32 %v2248, 0.0
      %v2473 = vmax.f32 %v2249, 0.0
      %v2474 = vmax.f32 %v2250, 0.0
      %v2475 = vmax.f32 %v2251, 0.0
      %v2476 = vmax.f32 %v2252, 0.0
      %v2477 = vmax.f32 %v2253, 0.0
      %v2478 = vmax.f32 %v2254, 0.0
      %v2479 = vmax.f32 %v2255, 0.0
      %v2480 = vmax.f32 %v2256, 0.0
      %v2481 = vmax.f32 %v2257, 0.0
      %v2482 = vmax.f32 %v2258, 0.0
      %v2483 = vmax.f32 %v2259, 0.0
      %v2484 = vmax.f32 %v2260, 0.0
      %v2485 = vmax.f32 %v2261, 0.0
      %v2486 = vmax.f32 %v2262, 0.0
      %v2487 = vmax.f32 %v2263, 0.0
      %v2488 = vmax.f32 %v2264, 0.0
      %v2489 = vmax.f32 %v2265, 0.0
      %v2490 = vmax.f32 %v2266, 0.0
      %v2491 = vmax.f32 %v2267, 0.0
      %v2492 = vmax.f32 %v2268, 0.0
      %v2493 = vmax.f32 %v2269, 0.0
      %v2494 = vmax.f32 %v2270, 0.0
      %v2495 = vmax.f32 %v2271, 0.0
      %v2496 = vmax.f32 %v2272, 0.0
      %v2497 = vmax.f32 %v2273, 0.0
      %v2498 = vmax.f32 %v2274, 0.0
      %v2499 = vmax.f32 %v2275, 0.0
      %v2500 = vmax.f32 %v2276, 0.0
      %v2501 = vmax.f32 %v2277, 0.0
      %v2502 = vmax.f32 %v2278, 0.0
      %v2503 = vmax.f32 %v2279, 0.0
      %v2504 = vmax.f32 %v2280, 0.0
      %v2505 = vmax.f32 %v2281, 0.0
      %v2506 = vmax.f32 %v2282, 0.0
      %v2507 = vmax.f32 %v2283, 0.0
      %v2508 = vmax.f32 %v2284, 0.0
      %v2509 = vmax.f32 %v2285, 0.0
      %v2510 = vmax.f32 %v2286, 0.0
      %v2511 = vmax.f32 %v2287, 0.0
      %v2512 = vmax.f32 %v2288, 0.0
      %v2513 = vmax.f32 %v2289, 0.0
      %v2514 = vmax.f32 %v2290, 0.0
      %v2515 = vmax.f32 %v2291, 0.0
      %v2516 = vmax.f32 %v2292, 0.0
      %v2517 = vmax.f32 %v2293, 0.0
      %v2518 = vmax.f32 %v2294, 0.0
      %v2519 = vmax.f32 %v2295, 0.0
      %v2520 = vmax.f32 %v2296, 0.0
      %v2521 = vmax.f32 %v2297, 0.0
      %v2522 = vmax.f32 %v2298, 0.0
      %v2523 = vmax.f32 %v2299, 0.0
      %v2524 = vmax.f32 %v2300, 0.0
      %v2525 = vmax.f32 %v2301, 0.0
      %v2526 = vmax.f32 %v2302, 0.0
      %v2527 = vmax.f32 %v2303, 0.0
      %v2528 = vmax.f32 %v2304, 0.0
      %v2529 = vmax.f32 %v2305, 0.0
      %v2530 = vmax.f32 %v2306, 0.0
      %v2531 = vmax.f32 %v2307, 0.0
      %v2532 = vmax.f32 %v2308, 0.0
      %v2533 = vmax.f32 %v2309, 0.0
      %v2534 = vmax.f32 %v2310, 0.0
      %v2535 = vmax.f32 %v2311, 0.0
      %v2536 = vmax.f32 %v2312, 0.0
      %v2537 = vmax.f32 %v2313, 0.0
      %v2538 = vmax.f32 %v2314, 0.0
      %v2539 = vmax.f32 %v2315, 0.0
      %v2540 = vmax.f32 %v2316, 0.0
      %v2541 = vmax.f32 %v2317, 0.0
      %v2542 = vmax.f32 %v2318, 0.0
      %v2543 = vmax.f32 %v2319, 0.0
      %v2544 = vmax.f32 %v2320, 0.0
      %v2545 = vmax.f32 %v2321, 0.0
      %v2546 = vmax.f32 %v2322, 0.0
      %v2547 = vmax.f32 %v2323, 0.0
      %v2548 = vmax.f32 %v2324, 0.0
      %v2549 = vmax.f32 %v2325, 0.0
      %v2550 = vmax.f32 %v2326, 0.0
      %v2551 = vmax.f32 %v2327, 0.0
      %v2552 = vmax.f32 %v2328, 0.0
      %v2553 = vmax.f32 %v2329, 0.0
      %v2554 = vmax.f32 %v2330, 0.0
      %v2555 = vmax.f32 %v2331, 0.0
      %v2556 = vmax.f32 %v2332, 0.0
      %v2557 = vmax.f32 %v2333, 0.0
      %v2558 = vmax.f32 %v2334, 0.0
      %v2559 = vmax.f32 %v2335, 0.0
      %v2560 = vmax.f32 %v2336, 0.0
      %v2561 = vmax.f32 %v2337, 0.0
      %v2562 = vmax.f32 %v2338, 0.0
      %v2563 = vmax.f32 %v2339, 0.0
      %v2564 = vmax.f32 %v2340, 0.0
      %v2565 = vmax.f32 %v2341, 0.0
      %v2566 = vmax.f32 %v2342, 0.0
      %v2567 = vmax.f32 %v2343, 0.0
      %v2568 = vmax.f32 %v2344, 0.0
      %v2569 = vmax.f32 %v2345, 0.0
      %v2570 = vmax.f32 %v2346, 0.0
      %v2571 = vmax.f32 %v2347, 0.0
      %v2572 = vmax.f32 %v2348, 0.0
      %v2573 = vmax.f32 %v2349, 0.0
      %v2574 = vmax.f32 %v2350, 0.0
      %v2575 = vmax.f32 %v2351, 0.0
      %v2576 = vmax.f32 %v2352, 0.0
      %v2577 = vmax.f32 %v2353, 0.0
      %v2578 = vmax.f32 %v2354, 0.0
      %v2579 = vmax.f32 %v2355, 0.0
      %v2580 = vmax.f32 %v2356, 0.0
      %v2581 = vmax.f32 %v2357, 0.0
      %v2582 = vmax.f32 %v2358, 0.0
      %2583 = vst [vmem:[%s177] sm:$0xff] %v2359
      %2584 = vst [vmem:[%s177 + $0x8] sm:$0xff] %v2360
      %2585 = vst [vmem:[%s177 + $0x10] sm:$0xff] %v2361
      %2586 = vst [vmem:[%s177 + $0x18] sm:$0xff] %v2362
      %2587 = vst [vmem:[%s177 + $0x20] sm:$0xff] %v2363
      %2588 = vst [vmem:[%s177 + $0x28] sm:$0xff] %v2364
      %2589 = vst.msk [vmem:[%s177 + $0x30] sm:$0xff] %vm408, %v2365
      %2590 = vst [vmem:[%s177 + $0x38] sm:$0xff] %v2366
      %2591 = vst [vmem:[%s177 + $0x40] sm:$0xff] %v2367
      %2592 = vst [vmem:[%s177 + $0x48] sm:$0xff] %v2368
      %2593 = vst [vmem:[%s177 + $0x50] sm:$0xff] %v2369
      %2594 = vst [vmem:[%s177 + $0x58] sm:$0xff] %v2370
      %2595 = vst [vmem:[%s177 + $0x60] sm:$0xff] %v2371
      %2596 = vst.msk [vmem:[%s177 + $0x68] sm:$0xff] %vm408, %v2372
      %2597 = vst [vmem:[%s177 + $0x70] sm:$0xff] %v2373
      %2598 = vst [vmem:[%s177 + $0x78] sm:$0xff] %v2374
      %2599 = vst [vmem:[%s177 + $0x80] sm:$0xff] %v2375
      %2600 = vst [vmem:[%s177 + $0x88] sm:$0xff] %v2376
      %2601 = vst [vmem:[%s177 + $0x90] sm:$0xff] %v2377
      %2602 = vst [vmem:[%s177 + $0x98] sm:$0xff] %v2378
      %2603 = vst.msk [vmem:[%s177 + $0xa0] sm:$0xff] %vm408, %v2379
      %2604 = vst [vmem:[%s177 + $0xa8] sm:$0xff] %v2380
      %2605 = vst [vmem:[%s177 + $0xb0] sm:$0xff] %v2381
      %2606 = vst [vmem:[%s177 + $0xb8] sm:$0xff] %v2382
      %2607 = vst [vmem:[%s177 + $0xc0] sm:$0xff] %v2383
      %2608 = vst [vmem:[%s177 + $0xc8] sm:$0xff] %v2384
      %2609 = vst [vmem:[%s177 + $0xd0] sm:$0xff] %v2385
      %2610 = vst.msk [vmem:[%s177 + $0xd8] sm:$0xff] %vm408, %v2386
      %2611 = vst [vmem:[%s177 + $0xe0] sm:$0xff] %v2387
      %2612 = vst [vmem:[%s177 + $0xe8] sm:$0xff] %v2388
      %2613 = vst [vmem:[%s177 + $0xf0] sm:$0xff] %v2389
      %2614 = vst [vmem:[%s177 + $0xf8] sm:$0xff] %v2390
      %2615 = vst [vmem:[%s177 + $0x100] sm:$0xff] %v2391
      %2616 = vst [vmem:[%s177 + $0x108] sm:$0xff] %v2392
      %2617 = vst.msk [vmem:[%s177 + $0x110] sm:$0xff] %vm408, %v2393
      %2618 = vst [vmem:[%s177 + $0x118] sm:$0xff] %v2394
      %2619 = vst [vmem:[%s177 + $0x120] sm:$0xff] %v2395
      %2620 = vst [vmem:[%s177 + $0x128] sm:$0xff] %v2396
      %2621 = vst [vmem:[%s177 + $0x130] sm:$0xff] %v2397
      %2622 = vst [vmem:[%s177 + $0x138] sm:$0xff] %v2398
      %2623 = vst [vmem:[%s177 + $0x140] sm:$0xff] %v2399
      %2624 = vst.msk [vmem:[%s177 + $0x148] sm:$0xff] %vm408, %v2400
      %2625 = vst [vmem:[%s177 + $0x150] sm:$0xff] %v2401
      %2626 = vst [vmem:[%s177 + $0x158] sm:$0xff] %v2402
      %2627 = vst [vmem:[%s177 + $0x160] sm:$0xff] %v2403
      %2628 = vst [vmem:[%s177 + $0x168] sm:$0xff] %v2404
      %2629 = vst [vmem:[%s177 + $0x170] sm:$0xff] %v2405
      %2630 = vst [vmem:[%s177 + $0x178] sm:$0xff] %v2406
      %2631 = vst.msk [vmem:[%s177 + $0x180] sm:$0xff] %vm408, %v2407
      %2632 = vst [vmem:[%s177 + $0x188] sm:$0xff] %v2408
      %2633 = vst [vmem:[%s177 + $0x190] sm:$0xff] %v2409
      %2634 = vst [vmem:[%s177 + $0x198] sm:$0xff] %v2410
      %2635 = vst [vmem:[%s177 + $0x1a0] sm:$0xff] %v2411
      %2636 = vst [vmem:[%s177 + $0x1a8] sm:$0xff] %v2412
      %2637 = vst [vmem:[%s177 + $0x1b0] sm:$0xff] %v2413
      %2638 = vst.msk [vmem:[%s177 + $0x1b8] sm:$0xff] %vm408, %v2414
      %2639 = vst [vmem:[%s177 + $0x1c0] sm:$0xff] %v2415
      %2640 = vst [vmem:[%s177 + $0x1c8] sm:$0xff] %v2416
      %2641 = vst [vmem:[%s177 + $0x1d0] sm:$0xff] %v2417
      %2642 = vst [vmem:[%s177 + $0x1d8] sm:$0xff] %v2418
      %2643 = vst [vmem:[%s177 + $0x1e0] sm:$0xff] %v2419
      %2644 = vst [vmem:[%s177 + $0x1e8] sm:$0xff] %v2420
      %2645 = vst.msk [vmem:[%s177 + $0x1f0] sm:$0xff] %vm408, %v2421
      %2646 = vst [vmem:[%s177 + $0x1f8] sm:$0xff] %v2422
      %2647 = vst [vmem:[%s177 + $0x200] sm:$0xff] %v2423
      %2648 = vst [vmem:[%s177 + $0x208] sm:$0xff] %v2424
      %2649 = vst [vmem:[%s177 + $0x210] sm:$0xff] %v2425
      %2650 = vst [vmem:[%s177 + $0x218] sm:$0xff] %v2426
      %2651 = vst [vmem:[%s177 + $0x220] sm:$0xff] %v2427
      %2652 = vst.msk [vmem:[%s177 + $0x228] sm:$0xff] %vm408, %v2428
      %2653 = vst [vmem:[%s177 + $0x230] sm:$0xff] %v2429
      %2654 = vst [vmem:[%s177 + $0x238] sm:$0xff] %v2430
      %2655 = vst [vmem:[%s177 + $0x240] sm:$0xff] %v2431
      %2656 = vst [vmem:[%s177 + $0x248] sm:$0xff] %v2432
      %2657 = vst [vmem:[%s177 + $0x250] sm:$0xff] %v2433
      %2658 = vst [vmem:[%s177 + $0x258] sm:$0xff] %v2434
      %2659 = vst.msk [vmem:[%s177 + $0x260] sm:$0xff] %vm408, %v2435
      %2660 = vst [vmem:[%s177 + $0x268] sm:$0xff] %v2436
      %2661 = vst [vmem:[%s177 + $0x270] sm:$0xff] %v2437
      %2662 = vst [vmem:[%s177 + $0x278] sm:$0xff] %v2438
      %2663 = vst [vmem:[%s177 + $0x280] sm:$0xff] %v2439
      %2664 = vst [vmem:[%s177 + $0x288] sm:$0xff] %v2440
      %2665 = vst [vmem:[%s177 + $0x290] sm:$0xff] %v2441
      %2666 = vst.msk [vmem:[%s177 + $0x298] sm:$0xff] %vm408, %v2442
      %2667 = vst [vmem:[%s177 + $0x2a0] sm:$0xff] %v2443
      %2668 = vst [vmem:[%s177 + $0x2a8] sm:$0xff] %v2444
      %2669 = vst [vmem:[%s177 + $0x2b0] sm:$0xff] %v2445
      %2670 = vst [vmem:[%s177 + $0x2b8] sm:$0xff] %v2446
      %2671 = vst [vmem:[%s177 + $0x2c0] sm:$0xff] %v2447
      %2672 = vst [vmem:[%s177 + $0x2c8] sm:$0xff] %v2448
      %2673 = vst.msk [vmem:[%s177 + $0x2d0] sm:$0xff] %vm408, %v2449
      %2674 = vst [vmem:[%s177 + $0x2d8] sm:$0xff] %v2450
      %2675 = vst [vmem:[%s177 + $0x2e0] sm:$0xff] %v2451
      %2676 = vst [vmem:[%s177 + $0x2e8] sm:$0xff] %v2452
      %2677 = vst [vmem:[%s177 + $0x2f0] sm:$0xff] %v2453
      %2678 = vst [vmem:[%s177 + $0x2f8] sm:$0xff] %v2454
      %2679 = vst [vmem:[%s177 + $0x300] sm:$0xff] %v2455
      %2680 = vst.msk [vmem:[%s177 + $0x308] sm:$0xff] %vm408, %v2456
      %2681 = vst [vmem:[%s177 + $0x310] sm:$0xff] %v2457
      %2682 = vst [vmem:[%s177 + $0x318] sm:$0xff] %v2458
      %2683 = vst [vmem:[%s177 + $0x320] sm:$0xff] %v2459
      %2684 = vst [vmem:[%s177 + $0x328] sm:$0xff] %v2460
      %2685 = vst [vmem:[%s177 + $0x330] sm:$0xff] %v2461
      %2686 = vst [vmem:[%s177 + $0x338] sm:$0xff] %v2462
      %2687 = vst.msk [vmem:[%s177 + $0x340] sm:$0xff] %vm408, %v2463
      %2688 = vst [vmem:[%s177 + $0x348] sm:$0xff] %v2464
      %2689 = vst [vmem:[%s177 + $0x350] sm:$0xff] %v2465
      %2690 = vst [vmem:[%s177 + $0x358] sm:$0xff] %v2466
      %2691 = vst [vmem:[%s177 + $0x360] sm:$0xff] %v2467
      %2692 = vst [vmem:[%s177 + $0x368] sm:$0xff] %v2468
      %2693 = vst [vmem:[%s177 + $0x370] sm:$0xff] %v2469
      %2694 = vst.msk [vmem:[%s177 + $0x378] sm:$0xff] %vm408, %v2470
      %2695 = vst [vmem:[%s177 + $0x380] sm:$0xff] %v2471
      %2696 = vst [vmem:[%s177 + $0x388] sm:$0xff] %v2472
      %2697 = vst [vmem:[%s177 + $0x390] sm:$0xff] %v2473
      %2698 = vst [vmem:[%s177 + $0x398] sm:$0xff] %v2474
      %2699 = vst [vmem:[%s177 + $0x3a0] sm:$0xff] %v2475
      %2700 = vst [vmem:[%s177 + $0x3a8] sm:$0xff] %v2476
      %2701 = vst.msk [vmem:[%s177 + $0x3b0] sm:$0xff] %vm408, %v2477
      %2702 = vst [vmem:[%s177 + $0x3b8] sm:$0xff] %v2478
      %2703 = vst [vmem:[%s177 + $0x3c0] sm:$0xff] %v2479
      %2704 = vst [vmem:[%s177 + $0x3c8] sm:$0xff] %v2480
      %2705 = vst [vmem:[%s177 + $0x3d0] sm:$0xff] %v2481
      %2706 = vst [vmem:[%s177 + $0x3d8] sm:$0xff] %v2482
      %2707 = vst [vmem:[%s177 + $0x3e0] sm:$0xff] %v2483
      %2708 = vst.msk [vmem:[%s177 + $0x3e8] sm:$0xff] %vm408, %v2484
      %2709 = vst [vmem:[%s177 + $0x3f0] sm:$0xff] %v2485
      %2710 = vst [vmem:[%s177 + $0x3f8] sm:$0xff] %v2486
      %2711 = vst [vmem:[%s177 + $0x400] sm:$0xff] %v2487
      %2712 = vst [vmem:[%s177 + $0x408] sm:$0xff] %v2488
      %2713 = vst [vmem:[%s177 + $0x410] sm:$0xff] %v2489
      %2714 = vst [vmem:[%s177 + $0x418] sm:$0xff] %v2490
      %2715 = vst.msk [vmem:[%s177 + $0x420] sm:$0xff] %vm408, %v2491
      %2716 = vst [vmem:[%s177 + $0x428] sm:$0xff] %v2492
      %2717 = vst [vmem:[%s177 + $0x430] sm:$0xff] %v2493
      %2718 = vst [vmem:[%s177 + $0x438] sm:$0xff] %v2494
      %2719 = vst [vmem:[%s177 + $0x440] sm:$0xff] %v2495
      %2720 = vst [vmem:[%s177 + $0x448] sm:$0xff] %v2496
      %2721 = vst [vmem:[%s177 + $0x450] sm:$0xff] %v2497
      %2722 = vst.msk [vmem:[%s177 + $0x458] sm:$0xff] %vm408, %v2498
      %2723 = vst [vmem:[%s177 + $0x460] sm:$0xff] %v2499
      %2724 = vst [vmem:[%s177 + $0x468] sm:$0xff] %v2500
      %2725 = vst [vmem:[%s177 + $0x470] sm:$0xff] %v2501
      %2726 = vst [vmem:[%s177 + $0x478] sm:$0xff] %v2502
      %2727 = vst [vmem:[%s177 + $0x480] sm:$0xff] %v2503
      %2728 = vst [vmem:[%s177 + $0x488] sm:$0xff] %v2504
      %2729 = vst.msk [vmem:[%s177 + $0x490] sm:$0xff] %vm408, %v2505
      %2730 = vst [vmem:[%s177 + $0x498] sm:$0xff] %v2506
      %2731 = vst [vmem:[%s177 + $0x4a0] sm:$0xff] %v2507
      %2732 = vst [vmem:[%s177 + $0x4a8] sm:$0xff] %v2508
      %2733 = vst [vmem:[%s177 + $0x4b0] sm:$0xff] %v2509
      %2734 = vst [vmem:[%s177 + $0x4b8] sm:$0xff] %v2510
      %2735 = vst [vmem:[%s177 + $0x4c0] sm:$0xff] %v2511
      %2736 = vst.msk [vmem:[%s177 + $0x4c8] sm:$0xff] %vm408, %v2512
      %2737 = vst [vmem:[%s177 + $0x4d0] sm:$0xff] %v2513
      %2738 = vst [vmem:[%s177 + $0x4d8] sm:$0xff] %v2514
      %2739 = vst [vmem:[%s177 + $0x4e0] sm:$0xff] %v2515
      %2740 = vst [vmem:[%s177 + $0x4e8] sm:$0xff] %v2516
      %2741 = vst [vmem:[%s177 + $0x4f0] sm:$0xff] %v2517
      %2742 = vst [vmem:[%s177 + $0x4f8] sm:$0xff] %v2518
      %2743 = vst.msk [vmem:[%s177 + $0x500] sm:$0xff] %vm408, %v2519
      %2744 = vst [vmem:[%s177 + $0x508] sm:$0xff] %v2520
      %2745 = vst [vmem:[%s177 + $0x510] sm:$0xff] %v2521
      %2746 = vst [vmem:[%s177 + $0x518] sm:$0xff] %v2522
      %2747 = vst [vmem:[%s177 + $0x520] sm:$0xff] %v2523
      %2748 = vst [vmem:[%s177 + $0x528] sm:$0xff] %v2524
      %2749 = vst [vmem:[%s177 + $0x530] sm:$0xff] %v2525
      %2750 = vst.msk [vmem:[%s177 + $0x538] sm:$0xff] %vm408, %v2526
      %2751 = vst [vmem:[%s177 + $0x540] sm:$0xff] %v2527
      %2752 = vst [vmem:[%s177 + $0x548] sm:$0xff] %v2528
      %2753 = vst [vmem:[%s177 + $0x550] sm:$0xff] %v2529
      %2754 = vst [vmem:[%s177 + $0x558] sm:$0xff] %v2530
      %2755 = vst [vmem:[%s177 + $0x560] sm:$0xff] %v2531
      %2756 = vst [vmem:[%s177 + $0x568] sm:$0xff] %v2532
      %2757 = vst.msk [vmem:[%s177 + $0x570] sm:$0xff] %vm408, %v2533
      %2758 = vst [vmem:[%s177 + $0x578] sm:$0xff] %v2534
      %2759 = vst [vmem:[%s177 + $0x580] sm:$0xff] %v2535
      %2760 = vst [vmem:[%s177 + $0x588] sm:$0xff] %v2536
      %2761 = vst [vmem:[%s177 + $0x590] sm:$0xff] %v2537
      %2762 = vst [vmem:[%s177 + $0x598] sm:$0xff] %v2538
      %2763 = vst [vmem:[%s177 + $0x5a0] sm:$0xff] %v2539
      %2764 = vst.msk [vmem:[%s177 + $0x5a8] sm:$0xff] %vm408, %v2540
      %2765 = vst [vmem:[%s177 + $0x5b0] sm:$0xff] %v2541
      %2766 = vst [vmem:[%s177 + $0x5b8] sm:$0xff] %v2542
      %2767 = vst [vmem:[%s177 + $0x5c0] sm:$0xff] %v2543
      %2768 = vst [vmem:[%s177 + $0x5c8] sm:$0xff] %v2544
      %2769 = vst [vmem:[%s177 + $0x5d0] sm:$0xff] %v2545
      %2770 = vst [vmem:[%s177 + $0x5d8] sm:$0xff] %v2546
      %2771 = vst.msk [vmem:[%s177 + $0x5e0] sm:$0xff] %vm408, %v2547
      %2772 = vst [vmem:[%s177 + $0x5e8] sm:$0xff] %v2548
      %2773 = vst [vmem:[%s177 + $0x5f0] sm:$0xff] %v2549
      %2774 = vst [vmem:[%s177 + $0x5f8] sm:$0xff] %v2550
      %2775 = vst [vmem:[%s177 + $0x600] sm:$0xff] %v2551
      %2776 = vst [vmem:[%s177 + $0x608] sm:$0xff] %v2552
      %2777 = vst [vmem:[%s177 + $0x610] sm:$0xff] %v2553
      %2778 = vst.msk [vmem:[%s177 + $0x618] sm:$0xff] %vm408, %v2554
      %2779 = vst [vmem:[%s177 + $0x620] sm:$0xff] %v2555
      %2780 = vst [vmem:[%s177 + $0x628] sm:$0xff] %v2556
      %2781 = vst [vmem:[%s177 + $0x630] sm:$0xff] %v2557
      %2782 = vst [vmem:[%s177 + $0x638] sm:$0xff] %v2558
      %2783 = vst [vmem:[%s177 + $0x640] sm:$0xff] %v2559
      %2784 = vst [vmem:[%s177 + $0x648] sm:$0xff] %v2560
      %2785 = vst.msk [vmem:[%s177 + $0x650] sm:$0xff] %vm408, %v2561
      %2786 = vst [vmem:[%s177 + $0x658] sm:$0xff] %v2562
      %2787 = vst [vmem:[%s177 + $0x660] sm:$0xff] %v2563
      %2788 = vst [vmem:[%s177 + $0x668] sm:$0xff] %v2564
      %2789 = vst [vmem:[%s177 + $0x670] sm:$0xff] %v2565
      %2790 = vst [vmem:[%s177 + $0x678] sm:$0xff] %v2566
      %2791 = vst [vmem:[%s177 + $0x680] sm:$0xff] %v2567
      %2792 = vst.msk [vmem:[%s177 + $0x688] sm:$0xff] %vm408, %v2568
      %2793 = vst [vmem:[%s177 + $0x690] sm:$0xff] %v2569
      %2794 = vst [vmem:[%s177 + $0x698] sm:$0xff] %v2570
      %2795 = vst [vmem:[%s177 + $0x6a0] sm:$0xff] %v2571
      %2796 = vst [vmem:[%s177 + $0x6a8] sm:$0xff] %v2572
      %2797 = vst [vmem:[%s177 + $0x6b0] sm:$0xff] %v2573
      %2798 = vst [vmem:[%s177 + $0x6b8] sm:$0xff] %v2574
      %2799 = vst.msk [vmem:[%s177 + $0x6c0] sm:$0xff] %vm408, %v2575
      %2800 = vst [vmem:[%s177 + $0x6c8] sm:$0xff] %v2576
      %2801 = vst [vmem:[%s177 + $0x6d0] sm:$0xff] %v2577
      %2802 = vst [vmem:[%s177 + $0x6d8] sm:$0xff] %v2578
      %2803 = vst [vmem:[%s177 + $0x6e0] sm:$0xff] %v2579
      %2804 = vst [vmem:[%s177 + $0x6e8] sm:$0xff] %v2580
      %2805 = vst [vmem:[%s177 + $0x6f0] sm:$0xff] %v2581
      %2806 = vst.msk [vmem:[%s177 + $0x6f8] sm:$0xff] %vm408, %v2582
      %s2807 = smul.u32 32, %s14
      %p2808 = scmp.lt.s32.totalorder %s2807, 63
      %s2809 = scalar_select %p2808, %s2807, 63
      %s2810 = smul.addr %s2809, 7
      %s2811 = smul.addr %s2810, 8
      %s2812 = scalar_lea.vmem %s3, %s2811
      // Predicated region
      $region33: #{tpu_custom_call.1} parent=31 // pred_check
        %p2813 = pneg %p100
      $region34: #{tpu_custom_call.1} parent=31 // pred_check_branch
        %2815 = sbr.rel (%p2813) target = $region36
      $region35: #{tpu_custom_call.1} parent=31 // pred_region
        %s2816 = smul.u32 32, %s14
      $region36: #{tpu_custom_call.1} parent=31 // pred_fallthru
        _
    $region32: #{tpu_custom_call.1} parent=5 // pred_fallthru
      _
    %p2817 = scmp.le.s32.totalorder 2, %s9
    // Predicated region
    $region37: #{tpu_custom_call.1} parent=5 // pred_check
      %p2818 = pneg %p2817
    $region38: #{tpu_custom_call.1} parent=5 // pred_check_branch
      %2820 = sbr.rel (%p2818) target = $region40
    $region39: #{tpu_custom_call.1} parent=5 // pred_region
      %s2821 = ssub.s32 %s9, 2
      // Predicated region
      $region41: #{tpu_custom_call.1} parent=39 // pred_check
        %p2822 = pneg %p106
      $region42: #{tpu_custom_call.1} parent=39 // pred_check_branch
        %2824 = sbr.rel (%p2822) target = $region44
      $region43: #{tpu_custom_call.1} parent=39 // pred_region
        %s2825 = smul.u32 32, %s15
        %p2826 = scmp.lt.s32.totalorder %s2825, 63
        %s2827 = scalar_select %p2826, %s2825, 63
        %s2828 = smul.addr %s2827, 7
        %s2829 = smul.addr %s2828, 8
        %s2830 = scalar_lea.vmem %s3, %s2829
      $region44: #{tpu_custom_call.1} parent=39 // pred_fallthru
        _
    $region40: #{tpu_custom_call.1} parent=5 // pred_fallthru
      _
  $region6: #{tpu_custom_call.1} parent=0 // loop_footer
    %s13 = sadd.s32 1, %s9
  $region7: #{tpu_custom_call.1} parent=0 // loop_footer_branch
    %8 = sbr.rel target = $region3
  $region8: #{tpu_custom_call.1} parent=0 // loop_exit
    _

</llo_original>
